<compile_context>
chip_gen: v5e
topology: v5e:2x2
jax: 0.10.0
libtpu: 0.0.40
codegen_flags: <defaults>
</compile_context>

<pallas_src>
import numpy as np
import jax
import jax.numpy as jnp
from jax import lax
from jax.experimental import pallas as pl
from jax.experimental.pallas import tpu as pltpu

K = 7       # kernel_size
P = 3       # reflect padding
CHUNK = 8   # channel-streaming chunk = sublane tile height


def _reflect_pad2d(a, p):
    """PyTorch-style 'reflect' padding (edge row/col not repeated) on a 2-D value."""
    H, W = a.shape
    top = [a[k:k + 1, :] for k in range(p, 0, -1)]           # rows p .. 1
    bot = [a[H - 2 - k:H - 1 - k, :] for k in range(p)]      # rows H-2 .. H-1-p
    a = jnp.concatenate(top + [a] + bot, axis=0)             # (H+2p, W)
    left = [a[:, k:k + 1] for k in range(p, 0, -1)]          # cols p .. 1
    right = [a[:, W - 2 - k:W - 1 - k] for k in range(p)]    # cols W-2 .. W-1-p
    return jnp.concatenate(left + [a] + right, axis=1)       # (H+2p, W+2p)


def _make_kernel(C, H, W):
    HW = H * W

    def kernel(w_ref, x_ref, o_ref):
        # w_ref: SMEM (2*K*K,) flat conv weight (OIHW order: avg-map then max-map).
        # x_ref / o_ref: VMEM (C, H*W) lane-dense block for one batch element.

        # Hoist all 98 scalar weight reads out of the conv loop.
        wv = [w_ref[i] for i in range(2 * K * K)]

        # ---- Pass 1: streaming channel mean / max on lane-dense (<=8, HW) chunks.
        sum_acc = None
        max_acc = None
        for c0 in range(0, C, CHUNK):               # C is static -> unrolled
            n = min(CHUNK, C - c0)
            xc = x_ref[c0:c0 + n, :].astype(jnp.float32)      # (n, HW)
            s = jnp.sum(xc, axis=0, keepdims=True)            # (1, HW)
            m = jnp.max(xc, axis=0, keepdims=True)            # (1, HW)
            if sum_acc is None:
                sum_acc, max_acc = s, m
            else:
                sum_acc = sum_acc + s
                max_acc = jnp.maximum(max_acc, m)
        avg = sum_acc * (1.0 / C)                             # (1, HW)
        mx = max_acc                                          # (1, HW)

        # ---- (1, HW) -> (H, W) for the small conv (XLU shifts on tiny maps only).
        avg2d = jnp.concatenate(
            [avg[:, y * W:(y + 1) * W] for y in range(H)], axis=0)   # (H, W)
        mx2d = jnp.concatenate(
            [mx[:, y * W:(y + 1) * W] for y in range(H)], axis=0)    # (H, W)

        pa = _reflect_pad2d(avg2d, P)                         # (H+2P, W+2P)
        pm = _reflect_pad2d(mx2d, P)                          # (H+2P, W+2P)

        # ---- 7x7x2 conv: lane shifts hoisted per dx; 4 independent acc chains.
        acc = [jnp.zeros((H, W), jnp.float32) for _ in range(4)]
        for dx in range(K):
            pa_dx = pa[:, dx:dx + W]                          # one lane shift per dx
            pm_dx = pm[:, dx:dx + W]
            for dy in range(K):
                j = dy & 1                                    # split chains by dy parity
                acc[j] = acc[j] + wv[dy * K + dx] * pa_dx[dy:dy + H, :]
                acc[2 + j] = acc[2 + j] + wv[K * K + dy * K + dx] * pm_dx[dy:dy + H, :]
        att2d = jax.nn.sigmoid((acc[0] + acc[1]) + (acc[2] + acc[3]))   # (H, W)

        # ---- (H, W) -> (1, HW) so the multiply/store path stays lane-dense.
        att = jnp.concatenate(
            [att2d[y:y + 1, :] for y in range(H)], axis=1)    # (1, HW)

        # ---- Pass 2: streaming broadcast multiply + dense stores.
        for c0 in range(0, C, CHUNK):
            n = min(CHUNK, C - c0)
            xc = x_ref[c0:c0 + n, :].astype(jnp.float32)
            o_ref[c0:c0 + n, :] = (xc * att).astype(o_ref.dtype)

    return kernel


def spatial_attention(feat, weight):
    """feat: (B, C, H, W); weight: (1, 2, K, K) float32 (OIHW, no bias)."""
    B, C, H, W = feat.shape
    assert H >= P + 1 and W >= P + 1, "reflect padding requires H, W >= 4"
    HW = H * W

    x2 = feat.reshape(B, C, HW)                   # layout plumbing only (free in XLA)
    w_flat = weight.astype(jnp.float32).reshape(-1)   # (2*K*K,), channel-major

    block_bytes = C * HW * jnp.dtype(feat.dtype).itemsize
    vmem_limit = int(min(96 * 2**20, max(32 * 2**20, 8 * block_bytes)))

    out = pl.pallas_call(
        _make_kernel(C, H, W),
        out_shape=jax.ShapeDtypeStruct((B, C, HW), feat.dtype),
        grid=(B,),
        in_specs=[
            pl.BlockSpec(memory_space=pltpu.MemorySpace.SMEM),        # weights
            pl.BlockSpec((None, C, HW), lambda b: (b, 0, 0)),         # feat block
        ],
        out_specs=pl.BlockSpec((None, C, HW), lambda b: (b, 0, 0)),
        compiler_params=pltpu.CompilerParams(
            dimension_semantics=("parallel",),
            vmem_limit_bytes=vmem_limit),
    )(w_flat, x2)

    return out.reshape(B, C, H, W)


def spatial_attention_ref(feat, weight):
    """Pure-JAX reference (mirrors the PyTorch module)."""
    avg = jnp.mean(feat, axis=1, keepdims=True)
    mx = jnp.max(feat, axis=1, keepdims=True)
    x = jnp.concatenate([avg, mx], axis=1)                      # (B, 2, H, W)
    xp = jnp.pad(x, ((0, 0), (0, 0), (P, P), (P, P)), mode="reflect")
    y = lax.conv_general_dilated(
        xp, weight, window_strides=(1, 1), padding="VALID",
        dimension_numbers=("NCHW", "OIHW", "NCHW"))             # (B, 1, H, W)
    return feat * jax.nn.sigmoid(y)


if __name__ == "__main__":
    key = jax.random.PRNGKey(0)
    kf, kw = jax.random.split(key)

    B, C, H, W = 2, 4, 16, 16
    feat = jax.random.normal(kf, (B, C, H, W), dtype=jnp.float32)

    # Deterministic init matching nn.Conv2d default scale: U(-1/sqrt(fan_in), 1/sqrt(fan_in))
    fan_in = 2 * K * K
    bound = 1.0 / np.sqrt(fan_in)
    weight = jax.random.uniform(kw, (1, 2, K, K), jnp.float32, -bound, bound)

    out = spatial_attention(feat, weight)
    out = jax.block_until_ready(out)

    ref = spatial_attention_ref(feat, weight)
    np.testing.assert_allclose(np.asarray(out), np.asarray(ref), rtol=1e-4, atol=1e-5)

    print("KERNEL_OK")
</pallas_src>

<mosaic_0001>
module attributes {stable_mosaic.version = 11 : i64} {
  func.func @kernel(%arg0: i32, %arg1: memref<98xf32, #tpu.memory_space<smem>>, %arg2: memref<1x4x256xf32, #tpu.memory_space<vmem>>, %arg3: memref<1x4x256xf32, #tpu.memory_space<vmem>>) attributes {dimension_semantics = [#tpu.dimension_semantics<parallel>], iteration_bounds = array<i64: 2>, scalar_prefetch = 0 : i64, scratch_operands = 0 : i64, tpu.core_type = #tpu.core_type<tc>, window_params = [{transform_indices = @transform_0, window_bounds = array<i64: 98>}, {transform_indices = @transform_1, window_bounds = array<i64: 1, 4, 256>}, {transform_indices = @transform_2, window_bounds = array<i64: 1, 4, 256>}]} {
    %c0 = arith.constant 0 : index
    %0 = memref.load %arg1[%c0] : memref<98xf32, #tpu.memory_space<smem>>
    %c1 = arith.constant 1 : index
    %1 = memref.load %arg1[%c1] : memref<98xf32, #tpu.memory_space<smem>>
    %c2 = arith.constant 2 : index
    %2 = memref.load %arg1[%c2] : memref<98xf32, #tpu.memory_space<smem>>
    %c3 = arith.constant 3 : index
    %3 = memref.load %arg1[%c3] : memref<98xf32, #tpu.memory_space<smem>>
    %c4 = arith.constant 4 : index
    %4 = memref.load %arg1[%c4] : memref<98xf32, #tpu.memory_space<smem>>
    %c5 = arith.constant 5 : index
    %5 = memref.load %arg1[%c5] : memref<98xf32, #tpu.memory_space<smem>>
    %c6 = arith.constant 6 : index
    %6 = memref.load %arg1[%c6] : memref<98xf32, #tpu.memory_space<smem>>
    %c7 = arith.constant 7 : index
    %7 = memref.load %arg1[%c7] : memref<98xf32, #tpu.memory_space<smem>>
    %c8 = arith.constant 8 : index
    %8 = memref.load %arg1[%c8] : memref<98xf32, #tpu.memory_space<smem>>
    %c9 = arith.constant 9 : index
    %9 = memref.load %arg1[%c9] : memref<98xf32, #tpu.memory_space<smem>>
    %c10 = arith.constant 10 : index
    %10 = memref.load %arg1[%c10] : memref<98xf32, #tpu.memory_space<smem>>
    %c11 = arith.constant 11 : index
    %11 = memref.load %arg1[%c11] : memref<98xf32, #tpu.memory_space<smem>>
    %c12 = arith.constant 12 : index
    %12 = memref.load %arg1[%c12] : memref<98xf32, #tpu.memory_space<smem>>
    %c13 = arith.constant 13 : index
    %13 = memref.load %arg1[%c13] : memref<98xf32, #tpu.memory_space<smem>>
    %c14 = arith.constant 14 : index
    %14 = memref.load %arg1[%c14] : memref<98xf32, #tpu.memory_space<smem>>
    %c15 = arith.constant 15 : index
    %15 = memref.load %arg1[%c15] : memref<98xf32, #tpu.memory_space<smem>>
    %c16 = arith.constant 16 : index
    %16 = memref.load %arg1[%c16] : memref<98xf32, #tpu.memory_space<smem>>
    %c17 = arith.constant 17 : index
    %17 = memref.load %arg1[%c17] : memref<98xf32, #tpu.memory_space<smem>>
    %c18 = arith.constant 18 : index
    %18 = memref.load %arg1[%c18] : memref<98xf32, #tpu.memory_space<smem>>
    %c19 = arith.constant 19 : index
    %19 = memref.load %arg1[%c19] : memref<98xf32, #tpu.memory_space<smem>>
    %c20 = arith.constant 20 : index
    %20 = memref.load %arg1[%c20] : memref<98xf32, #tpu.memory_space<smem>>
    %c21 = arith.constant 21 : index
    %21 = memref.load %arg1[%c21] : memref<98xf32, #tpu.memory_space<smem>>
    %c22 = arith.constant 22 : index
    %22 = memref.load %arg1[%c22] : memref<98xf32, #tpu.memory_space<smem>>
    %c23 = arith.constant 23 : index
    %23 = memref.load %arg1[%c23] : memref<98xf32, #tpu.memory_space<smem>>
    %c24 = arith.constant 24 : index
    %24 = memref.load %arg1[%c24] : memref<98xf32, #tpu.memory_space<smem>>
    %c25 = arith.constant 25 : index
    %25 = memref.load %arg1[%c25] : memref<98xf32, #tpu.memory_space<smem>>
    %c26 = arith.constant 26 : index
    %26 = memref.load %arg1[%c26] : memref<98xf32, #tpu.memory_space<smem>>
    %c27 = arith.constant 27 : index
    %27 = memref.load %arg1[%c27] : memref<98xf32, #tpu.memory_space<smem>>
    %c28 = arith.constant 28 : index
    %28 = memref.load %arg1[%c28] : memref<98xf32, #tpu.memory_space<smem>>
    %c29 = arith.constant 29 : index
    %29 = memref.load %arg1[%c29] : memref<98xf32, #tpu.memory_space<smem>>
    %c30 = arith.constant 30 : index
    %30 = memref.load %arg1[%c30] : memref<98xf32, #tpu.memory_space<smem>>
    %c31 = arith.constant 31 : index
    %31 = memref.load %arg1[%c31] : memref<98xf32, #tpu.memory_space<smem>>
    %c32 = arith.constant 32 : index
    %32 = memref.load %arg1[%c32] : memref<98xf32, #tpu.memory_space<smem>>
    %c33 = arith.constant 33 : index
    %33 = memref.load %arg1[%c33] : memref<98xf32, #tpu.memory_space<smem>>
    %c34 = arith.constant 34 : index
    %34 = memref.load %arg1[%c34] : memref<98xf32, #tpu.memory_space<smem>>
    %c35 = arith.constant 35 : index
    %35 = memref.load %arg1[%c35] : memref<98xf32, #tpu.memory_space<smem>>
    %c36 = arith.constant 36 : index
    %36 = memref.load %arg1[%c36] : memref<98xf32, #tpu.memory_space<smem>>
    %c37 = arith.constant 37 : index
    %37 = memref.load %arg1[%c37] : memref<98xf32, #tpu.memory_space<smem>>
    %c38 = arith.constant 38 : index
    %38 = memref.load %arg1[%c38] : memref<98xf32, #tpu.memory_space<smem>>
    %c39 = arith.constant 39 : index
    %39 = memref.load %arg1[%c39] : memref<98xf32, #tpu.memory_space<smem>>
    %c40 = arith.constant 40 : index
    %40 = memref.load %arg1[%c40] : memref<98xf32, #tpu.memory_space<smem>>
    %c41 = arith.constant 41 : index
    %41 = memref.load %arg1[%c41] : memref<98xf32, #tpu.memory_space<smem>>
    %c42 = arith.constant 42 : index
    %42 = memref.load %arg1[%c42] : memref<98xf32, #tpu.memory_space<smem>>
    %c43 = arith.constant 43 : index
    %43 = memref.load %arg1[%c43] : memref<98xf32, #tpu.memory_space<smem>>
    %c44 = arith.constant 44 : index
    %44 = memref.load %arg1[%c44] : memref<98xf32, #tpu.memory_space<smem>>
    %c45 = arith.constant 45 : index
    %45 = memref.load %arg1[%c45] : memref<98xf32, #tpu.memory_space<smem>>
    %c46 = arith.constant 46 : index
    %46 = memref.load %arg1[%c46] : memref<98xf32, #tpu.memory_space<smem>>
    %c47 = arith.constant 47 : index
    %47 = memref.load %arg1[%c47] : memref<98xf32, #tpu.memory_space<smem>>
    %c48 = arith.constant 48 : index
    %48 = memref.load %arg1[%c48] : memref<98xf32, #tpu.memory_space<smem>>
    %c49 = arith.constant 49 : index
    %49 = memref.load %arg1[%c49] : memref<98xf32, #tpu.memory_space<smem>>
    %c50 = arith.constant 50 : index
    %50 = memref.load %arg1[%c50] : memref<98xf32, #tpu.memory_space<smem>>
    %c51 = arith.constant 51 : index
    %51 = memref.load %arg1[%c51] : memref<98xf32, #tpu.memory_space<smem>>
    %c52 = arith.constant 52 : index
    %52 = memref.load %arg1[%c52] : memref<98xf32, #tpu.memory_space<smem>>
    %c53 = arith.constant 53 : index
    %53 = memref.load %arg1[%c53] : memref<98xf32, #tpu.memory_space<smem>>
    %c54 = arith.constant 54 : index
    %54 = memref.load %arg1[%c54] : memref<98xf32, #tpu.memory_space<smem>>
    %c55 = arith.constant 55 : index
    %55 = memref.load %arg1[%c55] : memref<98xf32, #tpu.memory_space<smem>>
    %c56 = arith.constant 56 : index
    %56 = memref.load %arg1[%c56] : memref<98xf32, #tpu.memory_space<smem>>
    %c57 = arith.constant 57 : index
    %57 = memref.load %arg1[%c57] : memref<98xf32, #tpu.memory_space<smem>>
    %c58 = arith.constant 58 : index
    %58 = memref.load %arg1[%c58] : memref<98xf32, #tpu.memory_space<smem>>
    %c59 = arith.constant 59 : index
    %59 = memref.load %arg1[%c59] : memref<98xf32, #tpu.memory_space<smem>>
    %c60 = arith.constant 60 : index
    %60 = memref.load %arg1[%c60] : memref<98xf32, #tpu.memory_space<smem>>
    %c61 = arith.constant 61 : index
    %61 = memref.load %arg1[%c61] : memref<98xf32, #tpu.memory_space<smem>>
    %c62 = arith.constant 62 : index
    %62 = memref.load %arg1[%c62] : memref<98xf32, #tpu.memory_space<smem>>
    %c63 = arith.constant 63 : index
    %63 = memref.load %arg1[%c63] : memref<98xf32, #tpu.memory_space<smem>>
    %c64 = arith.constant 64 : index
    %64 = memref.load %arg1[%c64] : memref<98xf32, #tpu.memory_space<smem>>
    %c65 = arith.constant 65 : index
    %65 = memref.load %arg1[%c65] : memref<98xf32, #tpu.memory_space<smem>>
    %c66 = arith.constant 66 : index
    %66 = memref.load %arg1[%c66] : memref<98xf32, #tpu.memory_space<smem>>
    %c67 = arith.constant 67 : index
    %67 = memref.load %arg1[%c67] : memref<98xf32, #tpu.memory_space<smem>>
    %c68 = arith.constant 68 : index
    %68 = memref.load %arg1[%c68] : memref<98xf32, #tpu.memory_space<smem>>
    %c69 = arith.constant 69 : index
    %69 = memref.load %arg1[%c69] : memref<98xf32, #tpu.memory_space<smem>>
    %c70 = arith.constant 70 : index
    %70 = memref.load %arg1[%c70] : memref<98xf32, #tpu.memory_space<smem>>
    %c71 = arith.constant 71 : index
    %71 = memref.load %arg1[%c71] : memref<98xf32, #tpu.memory_space<smem>>
    %c72 = arith.constant 72 : index
    %72 = memref.load %arg1[%c72] : memref<98xf32, #tpu.memory_space<smem>>
    %c73 = arith.constant 73 : index
    %73 = memref.load %arg1[%c73] : memref<98xf32, #tpu.memory_space<smem>>
    %c74 = arith.constant 74 : index
    %74 = memref.load %arg1[%c74] : memref<98xf32, #tpu.memory_space<smem>>
    %c75 = arith.constant 75 : index
    %75 = memref.load %arg1[%c75] : memref<98xf32, #tpu.memory_space<smem>>
    %c76 = arith.constant 76 : index
    %76 = memref.load %arg1[%c76] : memref<98xf32, #tpu.memory_space<smem>>
    %c77 = arith.constant 77 : index
    %77 = memref.load %arg1[%c77] : memref<98xf32, #tpu.memory_space<smem>>
    %c78 = arith.constant 78 : index
    %78 = memref.load %arg1[%c78] : memref<98xf32, #tpu.memory_space<smem>>
    %c79 = arith.constant 79 : index
    %79 = memref.load %arg1[%c79] : memref<98xf32, #tpu.memory_space<smem>>
    %c80 = arith.constant 80 : index
    %80 = memref.load %arg1[%c80] : memref<98xf32, #tpu.memory_space<smem>>
    %c81 = arith.constant 81 : index
    %81 = memref.load %arg1[%c81] : memref<98xf32, #tpu.memory_space<smem>>
    %c82 = arith.constant 82 : index
    %82 = memref.load %arg1[%c82] : memref<98xf32, #tpu.memory_space<smem>>
    %c83 = arith.constant 83 : index
    %83 = memref.load %arg1[%c83] : memref<98xf32, #tpu.memory_space<smem>>
    %c84 = arith.constant 84 : index
    %84 = memref.load %arg1[%c84] : memref<98xf32, #tpu.memory_space<smem>>
    %c85 = arith.constant 85 : index
    %85 = memref.load %arg1[%c85] : memref<98xf32, #tpu.memory_space<smem>>
    %c86 = arith.constant 86 : index
    %86 = memref.load %arg1[%c86] : memref<98xf32, #tpu.memory_space<smem>>
    %c87 = arith.constant 87 : index
    %87 = memref.load %arg1[%c87] : memref<98xf32, #tpu.memory_space<smem>>
    %c88 = arith.constant 88 : index
    %88 = memref.load %arg1[%c88] : memref<98xf32, #tpu.memory_space<smem>>
    %c89 = arith.constant 89 : index
    %89 = memref.load %arg1[%c89] : memref<98xf32, #tpu.memory_space<smem>>
    %c90 = arith.constant 90 : index
    %90 = memref.load %arg1[%c90] : memref<98xf32, #tpu.memory_space<smem>>
    %c91 = arith.constant 91 : index
    %91 = memref.load %arg1[%c91] : memref<98xf32, #tpu.memory_space<smem>>
    %c92 = arith.constant 92 : index
    %92 = memref.load %arg1[%c92] : memref<98xf32, #tpu.memory_space<smem>>
    %c93 = arith.constant 93 : index
    %93 = memref.load %arg1[%c93] : memref<98xf32, #tpu.memory_space<smem>>
    %c94 = arith.constant 94 : index
    %94 = memref.load %arg1[%c94] : memref<98xf32, #tpu.memory_space<smem>>
    %c95 = arith.constant 95 : index
    %95 = memref.load %arg1[%c95] : memref<98xf32, #tpu.memory_space<smem>>
    %c96 = arith.constant 96 : index
    %96 = memref.load %arg1[%c96] : memref<98xf32, #tpu.memory_space<smem>>
    %c97 = arith.constant 97 : index
    %97 = memref.load %arg1[%c97] : memref<98xf32, #tpu.memory_space<smem>>
    %c0_0 = arith.constant 0 : index
    %c0_1 = arith.constant 0 : index
    %c0_2 = arith.constant 0 : index
    %98 = vector.load %arg2[%c0_0, %c0_1, %c0_2] : memref<1x4x256xf32, #tpu.memory_space<vmem>>, vector<1x4x256xf32>
    %99 = vector.shape_cast %98 : vector<1x4x256xf32> to vector<4x256xf32>
    %cst = arith.constant dense<0.000000e+00> : vector<256xf32>
    %100 = vector.multi_reduction <add>, %99, %cst [0] : vector<4x256xf32> to vector<256xf32>
    %101 = vector.shape_cast %100 : vector<256xf32> to vector<1x256xf32>
    %cst_3 = arith.constant dense<0xFF800000> : vector<256xf32>
    %102 = vector.multi_reduction <maximumf>, %99, %cst_3 [0] : vector<4x256xf32> to vector<256xf32>
    %103 = vector.shape_cast %102 : vector<256xf32> to vector<1x256xf32>
    %cst_4 = arith.constant 2.500000e-01 : f32
    %104 = vector.broadcast %cst_4 : f32 to vector<1x256xf32>
    %105 = arith.mulf %101, %104 : vector<1x256xf32>
    %106 = vector.extract_strided_slice %105 {offsets = [0, 0], sizes = [1, 16], strides = [1, 1]} : vector<1x256xf32> to vector<1x16xf32>
    %107 = vector.extract_strided_slice %105 {offsets = [0, 16], sizes = [1, 16], strides = [1, 1]} : vector<1x256xf32> to vector<1x16xf32>
    %108 = vector.extract_strided_slice %105 {offsets = [0, 32], sizes = [1, 16], strides = [1, 1]} : vector<1x256xf32> to vector<1x16xf32>
    %109 = vector.extract_strided_slice %105 {offsets = [0, 48], sizes = [1, 16], strides = [1, 1]} : vector<1x256xf32> to vector<1x16xf32>
    %110 = vector.extract_strided_slice %105 {offsets = [0, 64], sizes = [1, 16], strides = [1, 1]} : vector<1x256xf32> to vector<1x16xf32>
    %111 = vector.extract_strided_slice %105 {offsets = [0, 80], sizes = [1, 16], strides = [1, 1]} : vector<1x256xf32> to vector<1x16xf32>
    %112 = vector.extract_strided_slice %105 {offsets = [0, 96], sizes = [1, 16], strides = [1, 1]} : vector<1x256xf32> to vector<1x16xf32>
    %113 = vector.extract_strided_slice %105 {offsets = [0, 112], sizes = [1, 16], strides = [1, 1]} : vector<1x256xf32> to vector<1x16xf32>
    %114 = vector.extract_strided_slice %105 {offsets = [0, 128], sizes = [1, 16], strides = [1, 1]} : vector<1x256xf32> to vector<1x16xf32>
    %115 = vector.extract_strided_slice %105 {offsets = [0, 144], sizes = [1, 16], strides = [1, 1]} : vector<1x256xf32> to vector<1x16xf32>
    %116 = vector.extract_strided_slice %105 {offsets = [0, 160], sizes = [1, 16], strides = [1, 1]} : vector<1x256xf32> to vector<1x16xf32>
    %117 = vector.extract_strided_slice %105 {offsets = [0, 176], sizes = [1, 16], strides = [1, 1]} : vector<1x256xf32> to vector<1x16xf32>
    %118 = vector.extract_strided_slice %105 {offsets = [0, 192], sizes = [1, 16], strides = [1, 1]} : vector<1x256xf32> to vector<1x16xf32>
    %119 = vector.extract_strided_slice %105 {offsets = [0, 208], sizes = [1, 16], strides = [1, 1]} : vector<1x256xf32> to vector<1x16xf32>
    %120 = vector.extract_strided_slice %105 {offsets = [0, 224], sizes = [1, 16], strides = [1, 1]} : vector<1x256xf32> to vector<1x16xf32>
    %121 = vector.extract_strided_slice %105 {offsets = [0, 240], sizes = [1, 16], strides = [1, 1]} : vector<1x256xf32> to vector<1x16xf32>
    %122 = tpu.concatenate %106, %107, %108, %109, %110, %111, %112, %113, %114, %115, %116, %117, %118, %119, %120, %121 in 0 : vector<1x16xf32>, vector<1x16xf32>, vector<1x16xf32>, vector<1x16xf32>, vector<1x16xf32>, vector<1x16xf32>, vector<1x16xf32>, vector<1x16xf32>, vector<1x16xf32>, vector<1x16xf32>, vector<1x16xf32>, vector<1x16xf32>, vector<1x16xf32>, vector<1x16xf32>, vector<1x16xf32>, vector<1x16xf32> -> vector<16x16xf32>
    %123 = vector.extract_strided_slice %103 {offsets = [0, 0], sizes = [1, 16], strides = [1, 1]} : vector<1x256xf32> to vector<1x16xf32>
    %124 = vector.extract_strided_slice %103 {offsets = [0, 16], sizes = [1, 16], strides = [1, 1]} : vector<1x256xf32> to vector<1x16xf32>
    %125 = vector.extract_strided_slice %103 {offsets = [0, 32], sizes = [1, 16], strides = [1, 1]} : vector<1x256xf32> to vector<1x16xf32>
    %126 = vector.extract_strided_slice %103 {offsets = [0, 48], sizes = [1, 16], strides = [1, 1]} : vector<1x256xf32> to vector<1x16xf32>
    %127 = vector.extract_strided_slice %103 {offsets = [0, 64], sizes = [1, 16], strides = [1, 1]} : vector<1x256xf32> to vector<1x16xf32>
    %128 = vector.extract_strided_slice %103 {offsets = [0, 80], sizes = [1, 16], strides = [1, 1]} : vector<1x256xf32> to vector<1x16xf32>
    %129 = vector.extract_strided_slice %103 {offsets = [0, 96], sizes = [1, 16], strides = [1, 1]} : vector<1x256xf32> to vector<1x16xf32>
    %130 = vector.extract_strided_slice %103 {offsets = [0, 112], sizes = [1, 16], strides = [1, 1]} : vector<1x256xf32> to vector<1x16xf32>
    %131 = vector.extract_strided_slice %103 {offsets = [0, 128], sizes = [1, 16], strides = [1, 1]} : vector<1x256xf32> to vector<1x16xf32>
    %132 = vector.extract_strided_slice %103 {offsets = [0, 144], sizes = [1, 16], strides = [1, 1]} : vector<1x256xf32> to vector<1x16xf32>
    %133 = vector.extract_strided_slice %103 {offsets = [0, 160], sizes = [1, 16], strides = [1, 1]} : vector<1x256xf32> to vector<1x16xf32>
    %134 = vector.extract_strided_slice %103 {offsets = [0, 176], sizes = [1, 16], strides = [1, 1]} : vector<1x256xf32> to vector<1x16xf32>
    %135 = vector.extract_strided_slice %103 {offsets = [0, 192], sizes = [1, 16], strides = [1, 1]} : vector<1x256xf32> to vector<1x16xf32>
    %136 = vector.extract_strided_slice %103 {offsets = [0, 208], sizes = [1, 16], strides = [1, 1]} : vector<1x256xf32> to vector<1x16xf32>
    %137 = vector.extract_strided_slice %103 {offsets = [0, 224], sizes = [1, 16], strides = [1, 1]} : vector<1x256xf32> to vector<1x16xf32>
    %138 = vector.extract_strided_slice %103 {offsets = [0, 240], sizes = [1, 16], strides = [1, 1]} : vector<1x256xf32> to vector<1x16xf32>
    %139 = tpu.concatenate %123, %124, %125, %126, %127, %128, %129, %130, %131, %132, %133, %134, %135, %136, %137, %138 in 0 : vector<1x16xf32>, vector<1x16xf32>, vector<1x16xf32>, vector<1x16xf32>, vector<1x16xf32>, vector<1x16xf32>, vector<1x16xf32>, vector<1x16xf32>, vector<1x16xf32>, vector<1x16xf32>, vector<1x16xf32>, vector<1x16xf32>, vector<1x16xf32>, vector<1x16xf32>, vector<1x16xf32>, vector<1x16xf32> -> vector<16x16xf32>
    %140 = vector.extract_strided_slice %122 {offsets = [3, 0], sizes = [1, 16], strides = [1, 1]} : vector<16x16xf32> to vector<1x16xf32>
    %141 = vector.extract_strided_slice %122 {offsets = [2, 0], sizes = [1, 16], strides = [1, 1]} : vector<16x16xf32> to vector<1x16xf32>
    %142 = vector.extract_strided_slice %122 {offsets = [1, 0], sizes = [1, 16], strides = [1, 1]} : vector<16x16xf32> to vector<1x16xf32>
    %143 = vector.extract_strided_slice %122 {offsets = [14, 0], sizes = [1, 16], strides = [1, 1]} : vector<16x16xf32> to vector<1x16xf32>
    %144 = vector.extract_strided_slice %122 {offsets = [13, 0], sizes = [1, 16], strides = [1, 1]} : vector<16x16xf32> to vector<1x16xf32>
    %145 = vector.extract_strided_slice %122 {offsets = [12, 0], sizes = [1, 16], strides = [1, 1]} : vector<16x16xf32> to vector<1x16xf32>
    %146 = tpu.concatenate %140, %141, %142, %122, %143, %144, %145 in 0 : vector<1x16xf32>, vector<1x16xf32>, vector<1x16xf32>, vector<16x16xf32>, vector<1x16xf32>, vector<1x16xf32>, vector<1x16xf32> -> vector<22x16xf32>
    %147 = vector.extract_strided_slice %146 {offsets = [0, 3], sizes = [22, 1], strides = [1, 1]} : vector<22x16xf32> to vector<22x1xf32>
    %148 = vector.extract_strided_slice %146 {offsets = [0, 2], sizes = [22, 1], strides = [1, 1]} : vector<22x16xf32> to vector<22x1xf32>
    %149 = vector.extract_strided_slice %146 {offsets = [0, 1], sizes = [22, 1], strides = [1, 1]} : vector<22x16xf32> to vector<22x1xf32>
    %150 = vector.extract_strided_slice %146 {offsets = [0, 14], sizes = [22, 1], strides = [1, 1]} : vector<22x16xf32> to vector<22x1xf32>
    %151 = vector.extract_strided_slice %146 {offsets = [0, 13], sizes = [22, 1], strides = [1, 1]} : vector<22x16xf32> to vector<22x1xf32>
    %152 = vector.extract_strided_slice %146 {offsets = [0, 12], sizes = [22, 1], strides = [1, 1]} : vector<22x16xf32> to vector<22x1xf32>
    %153 = tpu.concatenate %147, %148, %149, %146, %150, %151, %152 in 1 : vector<22x1xf32>, vector<22x1xf32>, vector<22x1xf32>, vector<22x16xf32>, vector<22x1xf32>, vector<22x1xf32>, vector<22x1xf32> -> vector<22x22xf32>
    %154 = vector.extract_strided_slice %139 {offsets = [3, 0], sizes = [1, 16], strides = [1, 1]} : vector<16x16xf32> to vector<1x16xf32>
    %155 = vector.extract_strided_slice %139 {offsets = [2, 0], sizes = [1, 16], strides = [1, 1]} : vector<16x16xf32> to vector<1x16xf32>
    %156 = vector.extract_strided_slice %139 {offsets = [1, 0], sizes = [1, 16], strides = [1, 1]} : vector<16x16xf32> to vector<1x16xf32>
    %157 = vector.extract_strided_slice %139 {offsets = [14, 0], sizes = [1, 16], strides = [1, 1]} : vector<16x16xf32> to vector<1x16xf32>
    %158 = vector.extract_strided_slice %139 {offsets = [13, 0], sizes = [1, 16], strides = [1, 1]} : vector<16x16xf32> to vector<1x16xf32>
    %159 = vector.extract_strided_slice %139 {offsets = [12, 0], sizes = [1, 16], strides = [1, 1]} : vector<16x16xf32> to vector<1x16xf32>
    %160 = tpu.concatenate %154, %155, %156, %139, %157, %158, %159 in 0 : vector<1x16xf32>, vector<1x16xf32>, vector<1x16xf32>, vector<16x16xf32>, vector<1x16xf32>, vector<1x16xf32>, vector<1x16xf32> -> vector<22x16xf32>
    %161 = vector.extract_strided_slice %160 {offsets = [0, 3], sizes = [22, 1], strides = [1, 1]} : vector<22x16xf32> to vector<22x1xf32>
    %162 = vector.extract_strided_slice %160 {offsets = [0, 2], sizes = [22, 1], strides = [1, 1]} : vector<22x16xf32> to vector<22x1xf32>
    %163 = vector.extract_strided_slice %160 {offsets = [0, 1], sizes = [22, 1], strides = [1, 1]} : vector<22x16xf32> to vector<22x1xf32>
    %164 = vector.extract_strided_slice %160 {offsets = [0, 14], sizes = [22, 1], strides = [1, 1]} : vector<22x16xf32> to vector<22x1xf32>
    %165 = vector.extract_strided_slice %160 {offsets = [0, 13], sizes = [22, 1], strides = [1, 1]} : vector<22x16xf32> to vector<22x1xf32>
    %166 = vector.extract_strided_slice %160 {offsets = [0, 12], sizes = [22, 1], strides = [1, 1]} : vector<22x16xf32> to vector<22x1xf32>
    %167 = tpu.concatenate %161, %162, %163, %160, %164, %165, %166 in 1 : vector<22x1xf32>, vector<22x1xf32>, vector<22x1xf32>, vector<22x16xf32>, vector<22x1xf32>, vector<22x1xf32>, vector<22x1xf32> -> vector<22x22xf32>
    %cst_5 = arith.constant 0.000000e+00 : f32
    %168 = vector.broadcast %cst_5 : f32 to vector<16x16xf32>
    %cst_6 = arith.constant 0.000000e+00 : f32
    %169 = vector.broadcast %cst_6 : f32 to vector<16x16xf32>
    %cst_7 = arith.constant 0.000000e+00 : f32
    %170 = vector.broadcast %cst_7 : f32 to vector<16x16xf32>
    %cst_8 = arith.constant 0.000000e+00 : f32
    %171 = vector.broadcast %cst_8 : f32 to vector<16x16xf32>
    %172 = vector.extract_strided_slice %153 {offsets = [0, 0], sizes = [22, 16], strides = [1, 1]} : vector<22x22xf32> to vector<22x16xf32>
    %173 = vector.extract_strided_slice %167 {offsets = [0, 0], sizes = [22, 16], strides = [1, 1]} : vector<22x22xf32> to vector<22x16xf32>
    %174 = vector.extract_strided_slice %172 {offsets = [0, 0], sizes = [16, 16], strides = [1, 1]} : vector<22x16xf32> to vector<16x16xf32>
    %175 = vector.broadcast %0 : f32 to vector<16x16xf32>
    %176 = arith.mulf %175, %174 : vector<16x16xf32>
    %177 = arith.addf %168, %176 : vector<16x16xf32>
    %178 = vector.extract_strided_slice %173 {offsets = [0, 0], sizes = [16, 16], strides = [1, 1]} : vector<22x16xf32> to vector<16x16xf32>
    %179 = vector.broadcast %49 : f32 to vector<16x16xf32>
    %180 = arith.mulf %179, %178 : vector<16x16xf32>
    %181 = arith.addf %170, %180 : vector<16x16xf32>
    %182 = vector.extract_strided_slice %172 {offsets = [1, 0], sizes = [16, 16], strides = [1, 1]} : vector<22x16xf32> to vector<16x16xf32>
    %183 = vector.broadcast %7 : f32 to vector<16x16xf32>
    %184 = arith.mulf %183, %182 : vector<16x16xf32>
    %185 = arith.addf %169, %184 : vector<16x16xf32>
    %186 = vector.extract_strided_slice %173 {offsets = [1, 0], sizes = [16, 16], strides = [1, 1]} : vector<22x16xf32> to vector<16x16xf32>
    %187 = vector.broadcast %56 : f32 to vector<16x16xf32>
    %188 = arith.mulf %187, %186 : vector<16x16xf32>
    %189 = arith.addf %171, %188 : vector<16x16xf32>
    %190 = vector.extract_strided_slice %172 {offsets = [2, 0], sizes = [16, 16], strides = [1, 1]} : vector<22x16xf32> to vector<16x16xf32>
    %191 = vector.broadcast %14 : f32 to vector<16x16xf32>
    %192 = arith.mulf %191, %190 : vector<16x16xf32>
    %193 = arith.addf %177, %192 : vector<16x16xf32>
    %194 = vector.extract_strided_slice %173 {offsets = [2, 0], sizes = [16, 16], strides = [1, 1]} : vector<22x16xf32> to vector<16x16xf32>
    %195 = vector.broadcast %63 : f32 to vector<16x16xf32>
    %196 = arith.mulf %195, %194 : vector<16x16xf32>
    %197 = arith.addf %181, %196 : vector<16x16xf32>
    %198 = vector.extract_strided_slice %172 {offsets = [3, 0], sizes = [16, 16], strides = [1, 1]} : vector<22x16xf32> to vector<16x16xf32>
    %199 = vector.broadcast %21 : f32 to vector<16x16xf32>
    %200 = arith.mulf %199, %198 : vector<16x16xf32>
    %201 = arith.addf %185, %200 : vector<16x16xf32>
    %202 = vector.extract_strided_slice %173 {offsets = [3, 0], sizes = [16, 16], strides = [1, 1]} : vector<22x16xf32> to vector<16x16xf32>
    %203 = vector.broadcast %70 : f32 to vector<16x16xf32>
    %204 = arith.mulf %203, %202 : vector<16x16xf32>
    %205 = arith.addf %189, %204 : vector<16x16xf32>
    %206 = vector.extract_strided_slice %172 {offsets = [4, 0], sizes = [16, 16], strides = [1, 1]} : vector<22x16xf32> to vector<16x16xf32>
    %207 = vector.broadcast %28 : f32 to vector<16x16xf32>
    %208 = arith.mulf %207, %206 : vector<16x16xf32>
    %209 = arith.addf %193, %208 : vector<16x16xf32>
    %210 = vector.extract_strided_slice %173 {offsets = [4, 0], sizes = [16, 16], strides = [1, 1]} : vector<22x16xf32> to vector<16x16xf32>
    %211 = vector.broadcast %77 : f32 to vector<16x16xf32>
    %212 = arith.mulf %211, %210 : vector<16x16xf32>
    %213 = arith.addf %197, %212 : vector<16x16xf32>
    %214 = vector.extract_strided_slice %172 {offsets = [5, 0], sizes = [16, 16], strides = [1, 1]} : vector<22x16xf32> to vector<16x16xf32>
    %215 = vector.broadcast %35 : f32 to vector<16x16xf32>
    %216 = arith.mulf %215, %214 : vector<16x16xf32>
    %217 = arith.addf %201, %216 : vector<16x16xf32>
    %218 = vector.extract_strided_slice %173 {offsets = [5, 0], sizes = [16, 16], strides = [1, 1]} : vector<22x16xf32> to vector<16x16xf32>
    %219 = vector.broadcast %84 : f32 to vector<16x16xf32>
    %220 = arith.mulf %219, %218 : vector<16x16xf32>
    %221 = arith.addf %205, %220 : vector<16x16xf32>
    %222 = vector.extract_strided_slice %172 {offsets = [6, 0], sizes = [16, 16], strides = [1, 1]} : vector<22x16xf32> to vector<16x16xf32>
    %223 = vector.broadcast %42 : f32 to vector<16x16xf32>
    %224 = arith.mulf %223, %222 : vector<16x16xf32>
    %225 = arith.addf %209, %224 : vector<16x16xf32>
    %226 = vector.extract_strided_slice %173 {offsets = [6, 0], sizes = [16, 16], strides = [1, 1]} : vector<22x16xf32> to vector<16x16xf32>
    %227 = vector.broadcast %91 : f32 to vector<16x16xf32>
    %228 = arith.mulf %227, %226 : vector<16x16xf32>
    %229 = arith.addf %213, %228 : vector<16x16xf32>
    %230 = vector.extract_strided_slice %153 {offsets = [0, 1], sizes = [22, 16], strides = [1, 1]} : vector<22x22xf32> to vector<22x16xf32>
    %231 = vector.extract_strided_slice %167 {offsets = [0, 1], sizes = [22, 16], strides = [1, 1]} : vector<22x22xf32> to vector<22x16xf32>
    %232 = vector.extract_strided_slice %230 {offsets = [0, 0], sizes = [16, 16], strides = [1, 1]} : vector<22x16xf32> to vector<16x16xf32>
    %233 = vector.broadcast %1 : f32 to vector<16x16xf32>
    %234 = arith.mulf %233, %232 : vector<16x16xf32>
    %235 = arith.addf %225, %234 : vector<16x16xf32>
    %236 = vector.extract_strided_slice %231 {offsets = [0, 0], sizes = [16, 16], strides = [1, 1]} : vector<22x16xf32> to vector<16x16xf32>
    %237 = vector.broadcast %50 : f32 to vector<16x16xf32>
    %238 = arith.mulf %237, %236 : vector<16x16xf32>
    %239 = arith.addf %229, %238 : vector<16x16xf32>
    %240 = vector.extract_strided_slice %230 {offsets = [1, 0], sizes = [16, 16], strides = [1, 1]} : vector<22x16xf32> to vector<16x16xf32>
    %241 = vector.broadcast %8 : f32 to vector<16x16xf32>
    %242 = arith.mulf %241, %240 : vector<16x16xf32>
    %243 = arith.addf %217, %242 : vector<16x16xf32>
    %244 = vector.extract_strided_slice %231 {offsets = [1, 0], sizes = [16, 16], strides = [1, 1]} : vector<22x16xf32> to vector<16x16xf32>
    %245 = vector.broadcast %57 : f32 to vector<16x16xf32>
    %246 = arith.mulf %245, %244 : vector<16x16xf32>
    %247 = arith.addf %221, %246 : vector<16x16xf32>
    %248 = vector.extract_strided_slice %230 {offsets = [2, 0], sizes = [16, 16], strides = [1, 1]} : vector<22x16xf32> to vector<16x16xf32>
    %249 = vector.broadcast %15 : f32 to vector<16x16xf32>
    %250 = arith.mulf %249, %248 : vector<16x16xf32>
    %251 = arith.addf %235, %250 : vector<16x16xf32>
    %252 = vector.extract_strided_slice %231 {offsets = [2, 0], sizes = [16, 16], strides = [1, 1]} : vector<22x16xf32> to vector<16x16xf32>
    %253 = vector.broadcast %64 : f32 to vector<16x16xf32>
    %254 = arith.mulf %253, %252 : vector<16x16xf32>
    %255 = arith.addf %239, %254 : vector<16x16xf32>
    %256 = vector.extract_strided_slice %230 {offsets = [3, 0], sizes = [16, 16], strides = [1, 1]} : vector<22x16xf32> to vector<16x16xf32>
    %257 = vector.broadcast %22 : f32 to vector<16x16xf32>
    %258 = arith.mulf %257, %256 : vector<16x16xf32>
    %259 = arith.addf %243, %258 : vector<16x16xf32>
    %260 = vector.extract_strided_slice %231 {offsets = [3, 0], sizes = [16, 16], strides = [1, 1]} : vector<22x16xf32> to vector<16x16xf32>
    %261 = vector.broadcast %71 : f32 to vector<16x16xf32>
    %262 = arith.mulf %261, %260 : vector<16x16xf32>
    %263 = arith.addf %247, %262 : vector<16x16xf32>
    %264 = vector.extract_strided_slice %230 {offsets = [4, 0], sizes = [16, 16], strides = [1, 1]} : vector<22x16xf32> to vector<16x16xf32>
    %265 = vector.broadcast %29 : f32 to vector<16x16xf32>
    %266 = arith.mulf %265, %264 : vector<16x16xf32>
    %267 = arith.addf %251, %266 : vector<16x16xf32>
    %268 = vector.extract_strided_slice %231 {offsets = [4, 0], sizes = [16, 16], strides = [1, 1]} : vector<22x16xf32> to vector<16x16xf32>
    %269 = vector.broadcast %78 : f32 to vector<16x16xf32>
    %270 = arith.mulf %269, %268 : vector<16x16xf32>
    %271 = arith.addf %255, %270 : vector<16x16xf32>
    %272 = vector.extract_strided_slice %230 {offsets = [5, 0], sizes = [16, 16], strides = [1, 1]} : vector<22x16xf32> to vector<16x16xf32>
    %273 = vector.broadcast %36 : f32 to vector<16x16xf32>
    %274 = arith.mulf %273, %272 : vector<16x16xf32>
    %275 = arith.addf %259, %274 : vector<16x16xf32>
    %276 = vector.extract_strided_slice %231 {offsets = [5, 0], sizes = [16, 16], strides = [1, 1]} : vector<22x16xf32> to vector<16x16xf32>
    %277 = vector.broadcast %85 : f32 to vector<16x16xf32>
    %278 = arith.mulf %277, %276 : vector<16x16xf32>
    %279 = arith.addf %263, %278 : vector<16x16xf32>
    %280 = vector.extract_strided_slice %230 {offsets = [6, 0], sizes = [16, 16], strides = [1, 1]} : vector<22x16xf32> to vector<16x16xf32>
    %281 = vector.broadcast %43 : f32 to vector<16x16xf32>
    %282 = arith.mulf %281, %280 : vector<16x16xf32>
    %283 = arith.addf %267, %282 : vector<16x16xf32>
    %284 = vector.extract_strided_slice %231 {offsets = [6, 0], sizes = [16, 16], strides = [1, 1]} : vector<22x16xf32> to vector<16x16xf32>
    %285 = vector.broadcast %92 : f32 to vector<16x16xf32>
    %286 = arith.mulf %285, %284 : vector<16x16xf32>
    %287 = arith.addf %271, %286 : vector<16x16xf32>
    %288 = vector.extract_strided_slice %153 {offsets = [0, 2], sizes = [22, 16], strides = [1, 1]} : vector<22x22xf32> to vector<22x16xf32>
    %289 = vector.extract_strided_slice %167 {offsets = [0, 2], sizes = [22, 16], strides = [1, 1]} : vector<22x22xf32> to vector<22x16xf32>
    %290 = vector.extract_strided_slice %288 {offsets = [0, 0], sizes = [16, 16], strides = [1, 1]} : vector<22x16xf32> to vector<16x16xf32>
    %291 = vector.broadcast %2 : f32 to vector<16x16xf32>
    %292 = arith.mulf %291, %290 : vector<16x16xf32>
    %293 = arith.addf %283, %292 : vector<16x16xf32>
    %294 = vector.extract_strided_slice %289 {offsets = [0, 0], sizes = [16, 16], strides = [1, 1]} : vector<22x16xf32> to vector<16x16xf32>
    %295 = vector.broadcast %51 : f32 to vector<16x16xf32>
    %296 = arith.mulf %295, %294 : vector<16x16xf32>
    %297 = arith.addf %287, %296 : vector<16x16xf32>
    %298 = vector.extract_strided_slice %288 {offsets = [1, 0], sizes = [16, 16], strides = [1, 1]} : vector<22x16xf32> to vector<16x16xf32>
    %299 = vector.broadcast %9 : f32 to vector<16x16xf32>
    %300 = arith.mulf %299, %298 : vector<16x16xf32>
    %301 = arith.addf %275, %300 : vector<16x16xf32>
    %302 = vector.extract_strided_slice %289 {offsets = [1, 0], sizes = [16, 16], strides = [1, 1]} : vector<22x16xf32> to vector<16x16xf32>
    %303 = vector.broadcast %58 : f32 to vector<16x16xf32>
    %304 = arith.mulf %303, %302 : vector<16x16xf32>
    %305 = arith.addf %279, %304 : vector<16x16xf32>
    %306 = vector.extract_strided_slice %288 {offsets = [2, 0], sizes = [16, 16], strides = [1, 1]} : vector<22x16xf32> to vector<16x16xf32>
    %307 = vector.broadcast %16 : f32 to vector<16x16xf32>
    %308 = arith.mulf %307, %306 : vector<16x16xf32>
    %309 = arith.addf %293, %308 : vector<16x16xf32>
    %310 = vector.extract_strided_slice %289 {offsets = [2, 0], sizes = [16, 16], strides = [1, 1]} : vector<22x16xf32> to vector<16x16xf32>
    %311 = vector.broadcast %65 : f32 to vector<16x16xf32>
    %312 = arith.mulf %311, %310 : vector<16x16xf32>
    %313 = arith.addf %297, %312 : vector<16x16xf32>
    %314 = vector.extract_strided_slice %288 {offsets = [3, 0], sizes = [16, 16], strides = [1, 1]} : vector<22x16xf32> to vector<16x16xf32>
    %315 = vector.broadcast %23 : f32 to vector<16x16xf32>
    %316 = arith.mulf %315, %314 : vector<16x16xf32>
    %317 = arith.addf %301, %316 : vector<16x16xf32>
    %318 = vector.extract_strided_slice %289 {offsets = [3, 0], sizes = [16, 16], strides = [1, 1]} : vector<22x16xf32> to vector<16x16xf32>
    %319 = vector.broadcast %72 : f32 to vector<16x16xf32>
    %320 = arith.mulf %319, %318 : vector<16x16xf32>
    %321 = arith.addf %305, %320 : vector<16x16xf32>
    %322 = vector.extract_strided_slice %288 {offsets = [4, 0], sizes = [16, 16], strides = [1, 1]} : vector<22x16xf32> to vector<16x16xf32>
    %323 = vector.broadcast %30 : f32 to vector<16x16xf32>
    %324 = arith.mulf %323, %322 : vector<16x16xf32>
    %325 = arith.addf %309, %324 : vector<16x16xf32>
    %326 = vector.extract_strided_slice %289 {offsets = [4, 0], sizes = [16, 16], strides = [1, 1]} : vector<22x16xf32> to vector<16x16xf32>
    %327 = vector.broadcast %79 : f32 to vector<16x16xf32>
    %328 = arith.mulf %327, %326 : vector<16x16xf32>
    %329 = arith.addf %313, %328 : vector<16x16xf32>
    %330 = vector.extract_strided_slice %288 {offsets = [5, 0], sizes = [16, 16], strides = [1, 1]} : vector<22x16xf32> to vector<16x16xf32>
    %331 = vector.broadcast %37 : f32 to vector<16x16xf32>
    %332 = arith.mulf %331, %330 : vector<16x16xf32>
    %333 = arith.addf %317, %332 : vector<16x16xf32>
    %334 = vector.extract_strided_slice %289 {offsets = [5, 0], sizes = [16, 16], strides = [1, 1]} : vector<22x16xf32> to vector<16x16xf32>
    %335 = vector.broadcast %86 : f32 to vector<16x16xf32>
    %336 = arith.mulf %335, %334 : vector<16x16xf32>
    %337 = arith.addf %321, %336 : vector<16x16xf32>
    %338 = vector.extract_strided_slice %288 {offsets = [6, 0], sizes = [16, 16], strides = [1, 1]} : vector<22x16xf32> to vector<16x16xf32>
    %339 = vector.broadcast %44 : f32 to vector<16x16xf32>
    %340 = arith.mulf %339, %338 : vector<16x16xf32>
    %341 = arith.addf %325, %340 : vector<16x16xf32>
    %342 = vector.extract_strided_slice %289 {offsets = [6, 0], sizes = [16, 16], strides = [1, 1]} : vector<22x16xf32> to vector<16x16xf32>
    %343 = vector.broadcast %93 : f32 to vector<16x16xf32>
    %344 = arith.mulf %343, %342 : vector<16x16xf32>
    %345 = arith.addf %329, %344 : vector<16x16xf32>
    %346 = vector.extract_strided_slice %153 {offsets = [0, 3], sizes = [22, 16], strides = [1, 1]} : vector<22x22xf32> to vector<22x16xf32>
    %347 = vector.extract_strided_slice %167 {offsets = [0, 3], sizes = [22, 16], strides = [1, 1]} : vector<22x22xf32> to vector<22x16xf32>
    %348 = vector.extract_strided_slice %346 {offsets = [0, 0], sizes = [16, 16], strides = [1, 1]} : vector<22x16xf32> to vector<16x16xf32>
    %349 = vector.broadcast %3 : f32 to vector<16x16xf32>
    %350 = arith.mulf %349, %348 : vector<16x16xf32>
    %351 = arith.addf %341, %350 : vector<16x16xf32>
    %352 = vector.extract_strided_slice %347 {offsets = [0, 0], sizes = [16, 16], strides = [1, 1]} : vector<22x16xf32> to vector<16x16xf32>
    %353 = vector.broadcast %52 : f32 to vector<16x16xf32>
    %354 = arith.mulf %353, %352 : vector<16x16xf32>
    %355 = arith.addf %345, %354 : vector<16x16xf32>
    %356 = vector.extract_strided_slice %346 {offsets = [1, 0], sizes = [16, 16], strides = [1, 1]} : vector<22x16xf32> to vector<16x16xf32>
    %357 = vector.broadcast %10 : f32 to vector<16x16xf32>
    %358 = arith.mulf %357, %356 : vector<16x16xf32>
    %359 = arith.addf %333, %358 : vector<16x16xf32>
    %360 = vector.extract_strided_slice %347 {offsets = [1, 0], sizes = [16, 16], strides = [1, 1]} : vector<22x16xf32> to vector<16x16xf32>
    %361 = vector.broadcast %59 : f32 to vector<16x16xf32>
    %362 = arith.mulf %361, %360 : vector<16x16xf32>
    %363 = arith.addf %337, %362 : vector<16x16xf32>
    %364 = vector.extract_strided_slice %346 {offsets = [2, 0], sizes = [16, 16], strides = [1, 1]} : vector<22x16xf32> to vector<16x16xf32>
    %365 = vector.broadcast %17 : f32 to vector<16x16xf32>
    %366 = arith.mulf %365, %364 : vector<16x16xf32>
    %367 = arith.addf %351, %366 : vector<16x16xf32>
    %368 = vector.extract_strided_slice %347 {offsets = [2, 0], sizes = [16, 16], strides = [1, 1]} : vector<22x16xf32> to vector<16x16xf32>
    %369 = vector.broadcast %66 : f32 to vector<16x16xf32>
    %370 = arith.mulf %369, %368 : vector<16x16xf32>
    %371 = arith.addf %355, %370 : vector<16x16xf32>
    %372 = vector.extract_strided_slice %346 {offsets = [3, 0], sizes = [16, 16], strides = [1, 1]} : vector<22x16xf32> to vector<16x16xf32>
    %373 = vector.broadcast %24 : f32 to vector<16x16xf32>
    %374 = arith.mulf %373, %372 : vector<16x16xf32>
    %375 = arith.addf %359, %374 : vector<16x16xf32>
    %376 = vector.extract_strided_slice %347 {offsets = [3, 0], sizes = [16, 16], strides = [1, 1]} : vector<22x16xf32> to vector<16x16xf32>
    %377 = vector.broadcast %73 : f32 to vector<16x16xf32>
    %378 = arith.mulf %377, %376 : vector<16x16xf32>
    %379 = arith.addf %363, %378 : vector<16x16xf32>
    %380 = vector.extract_strided_slice %346 {offsets = [4, 0], sizes = [16, 16], strides = [1, 1]} : vector<22x16xf32> to vector<16x16xf32>
    %381 = vector.broadcast %31 : f32 to vector<16x16xf32>
    %382 = arith.mulf %381, %380 : vector<16x16xf32>
    %383 = arith.addf %367, %382 : vector<16x16xf32>
    %384 = vector.extract_strided_slice %347 {offsets = [4, 0], sizes = [16, 16], strides = [1, 1]} : vector<22x16xf32> to vector<16x16xf32>
    %385 = vector.broadcast %80 : f32 to vector<16x16xf32>
    %386 = arith.mulf %385, %384 : vector<16x16xf32>
    %387 = arith.addf %371, %386 : vector<16x16xf32>
    %388 = vector.extract_strided_slice %346 {offsets = [5, 0], sizes = [16, 16], strides = [1, 1]} : vector<22x16xf32> to vector<16x16xf32>
    %389 = vector.broadcast %38 : f32 to vector<16x16xf32>
    %390 = arith.mulf %389, %388 : vector<16x16xf32>
    %391 = arith.addf %375, %390 : vector<16x16xf32>
    %392 = vector.extract_strided_slice %347 {offsets = [5, 0], sizes = [16, 16], strides = [1, 1]} : vector<22x16xf32> to vector<16x16xf32>
    %393 = vector.broadcast %87 : f32 to vector<16x16xf32>
    %394 = arith.mulf %393, %392 : vector<16x16xf32>
    %395 = arith.addf %379, %394 : vector<16x16xf32>
    %396 = vector.extract_strided_slice %346 {offsets = [6, 0], sizes = [16, 16], strides = [1, 1]} : vector<22x16xf32> to vector<16x16xf32>
    %397 = vector.broadcast %45 : f32 to vector<16x16xf32>
    %398 = arith.mulf %397, %396 : vector<16x16xf32>
    %399 = arith.addf %383, %398 : vector<16x16xf32>
    %400 = vector.extract_strided_slice %347 {offsets = [6, 0], sizes = [16, 16], strides = [1, 1]} : vector<22x16xf32> to vector<16x16xf32>
    %401 = vector.broadcast %94 : f32 to vector<16x16xf32>
    %402 = arith.mulf %401, %400 : vector<16x16xf32>
    %403 = arith.addf %387, %402 : vector<16x16xf32>
    %404 = vector.extract_strided_slice %153 {offsets = [0, 4], sizes = [22, 16], strides = [1, 1]} : vector<22x22xf32> to vector<22x16xf32>
    %405 = vector.extract_strided_slice %167 {offsets = [0, 4], sizes = [22, 16], strides = [1, 1]} : vector<22x22xf32> to vector<22x16xf32>
    %406 = vector.extract_strided_slice %404 {offsets = [0, 0], sizes = [16, 16], strides = [1, 1]} : vector<22x16xf32> to vector<16x16xf32>
    %407 = vector.broadcast %4 : f32 to vector<16x16xf32>
    %408 = arith.mulf %407, %406 : vector<16x16xf32>
    %409 = arith.addf %399, %408 : vector<16x16xf32>
    %410 = vector.extract_strided_slice %405 {offsets = [0, 0], sizes = [16, 16], strides = [1, 1]} : vector<22x16xf32> to vector<16x16xf32>
    %411 = vector.broadcast %53 : f32 to vector<16x16xf32>
    %412 = arith.mulf %411, %410 : vector<16x16xf32>
    %413 = arith.addf %403, %412 : vector<16x16xf32>
    %414 = vector.extract_strided_slice %404 {offsets = [1, 0], sizes = [16, 16], strides = [1, 1]} : vector<22x16xf32> to vector<16x16xf32>
    %415 = vector.broadcast %11 : f32 to vector<16x16xf32>
    %416 = arith.mulf %415, %414 : vector<16x16xf32>
    %417 = arith.addf %391, %416 : vector<16x16xf32>
    %418 = vector.extract_strided_slice %405 {offsets = [1, 0], sizes = [16, 16], strides = [1, 1]} : vector<22x16xf32> to vector<16x16xf32>
    %419 = vector.broadcast %60 : f32 to vector<16x16xf32>
    %420 = arith.mulf %419, %418 : vector<16x16xf32>
    %421 = arith.addf %395, %420 : vector<16x16xf32>
    %422 = vector.extract_strided_slice %404 {offsets = [2, 0], sizes = [16, 16], strides = [1, 1]} : vector<22x16xf32> to vector<16x16xf32>
    %423 = vector.broadcast %18 : f32 to vector<16x16xf32>
    %424 = arith.mulf %423, %422 : vector<16x16xf32>
    %425 = arith.addf %409, %424 : vector<16x16xf32>
    %426 = vector.extract_strided_slice %405 {offsets = [2, 0], sizes = [16, 16], strides = [1, 1]} : vector<22x16xf32> to vector<16x16xf32>
    %427 = vector.broadcast %67 : f32 to vector<16x16xf32>
    %428 = arith.mulf %427, %426 : vector<16x16xf32>
    %429 = arith.addf %413, %428 : vector<16x16xf32>
    %430 = vector.extract_strided_slice %404 {offsets = [3, 0], sizes = [16, 16], strides = [1, 1]} : vector<22x16xf32> to vector<16x16xf32>
    %431 = vector.broadcast %25 : f32 to vector<16x16xf32>
    %432 = arith.mulf %431, %430 : vector<16x16xf32>
    %433 = arith.addf %417, %432 : vector<16x16xf32>
    %434 = vector.extract_strided_slice %405 {offsets = [3, 0], sizes = [16, 16], strides = [1, 1]} : vector<22x16xf32> to vector<16x16xf32>
    %435 = vector.broadcast %74 : f32 to vector<16x16xf32>
    %436 = arith.mulf %435, %434 : vector<16x16xf32>
    %437 = arith.addf %421, %436 : vector<16x16xf32>
    %438 = vector.extract_strided_slice %404 {offsets = [4, 0], sizes = [16, 16], strides = [1, 1]} : vector<22x16xf32> to vector<16x16xf32>
    %439 = vector.broadcast %32 : f32 to vector<16x16xf32>
    %440 = arith.mulf %439, %438 : vector<16x16xf32>
    %441 = arith.addf %425, %440 : vector<16x16xf32>
    %442 = vector.extract_strided_slice %405 {offsets = [4, 0], sizes = [16, 16], strides = [1, 1]} : vector<22x16xf32> to vector<16x16xf32>
    %443 = vector.broadcast %81 : f32 to vector<16x16xf32>
    %444 = arith.mulf %443, %442 : vector<16x16xf32>
    %445 = arith.addf %429, %444 : vector<16x16xf32>
    %446 = vector.extract_strided_slice %404 {offsets = [5, 0], sizes = [16, 16], strides = [1, 1]} : vector<22x16xf32> to vector<16x16xf32>
    %447 = vector.broadcast %39 : f32 to vector<16x16xf32>
    %448 = arith.mulf %447, %446 : vector<16x16xf32>
    %449 = arith.addf %433, %448 : vector<16x16xf32>
    %450 = vector.extract_strided_slice %405 {offsets = [5, 0], sizes = [16, 16], strides = [1, 1]} : vector<22x16xf32> to vector<16x16xf32>
    %451 = vector.broadcast %88 : f32 to vector<16x16xf32>
    %452 = arith.mulf %451, %450 : vector<16x16xf32>
    %453 = arith.addf %437, %452 : vector<16x16xf32>
    %454 = vector.extract_strided_slice %404 {offsets = [6, 0], sizes = [16, 16], strides = [1, 1]} : vector<22x16xf32> to vector<16x16xf32>
    %455 = vector.broadcast %46 : f32 to vector<16x16xf32>
    %456 = arith.mulf %455, %454 : vector<16x16xf32>
    %457 = arith.addf %441, %456 : vector<16x16xf32>
    %458 = vector.extract_strided_slice %405 {offsets = [6, 0], sizes = [16, 16], strides = [1, 1]} : vector<22x16xf32> to vector<16x16xf32>
    %459 = vector.broadcast %95 : f32 to vector<16x16xf32>
    %460 = arith.mulf %459, %458 : vector<16x16xf32>
    %461 = arith.addf %445, %460 : vector<16x16xf32>
    %462 = vector.extract_strided_slice %153 {offsets = [0, 5], sizes = [22, 16], strides = [1, 1]} : vector<22x22xf32> to vector<22x16xf32>
    %463 = vector.extract_strided_slice %167 {offsets = [0, 5], sizes = [22, 16], strides = [1, 1]} : vector<22x22xf32> to vector<22x16xf32>
    %464 = vector.extract_strided_slice %462 {offsets = [0, 0], sizes = [16, 16], strides = [1, 1]} : vector<22x16xf32> to vector<16x16xf32>
    %465 = vector.broadcast %5 : f32 to vector<16x16xf32>
    %466 = arith.mulf %465, %464 : vector<16x16xf32>
    %467 = arith.addf %457, %466 : vector<16x16xf32>
    %468 = vector.extract_strided_slice %463 {offsets = [0, 0], sizes = [16, 16], strides = [1, 1]} : vector<22x16xf32> to vector<16x16xf32>
    %469 = vector.broadcast %54 : f32 to vector<16x16xf32>
    %470 = arith.mulf %469, %468 : vector<16x16xf32>
    %471 = arith.addf %461, %470 : vector<16x16xf32>
    %472 = vector.extract_strided_slice %462 {offsets = [1, 0], sizes = [16, 16], strides = [1, 1]} : vector<22x16xf32> to vector<16x16xf32>
    %473 = vector.broadcast %12 : f32 to vector<16x16xf32>
    %474 = arith.mulf %473, %472 : vector<16x16xf32>
    %475 = arith.addf %449, %474 : vector<16x16xf32>
    %476 = vector.extract_strided_slice %463 {offsets = [1, 0], sizes = [16, 16], strides = [1, 1]} : vector<22x16xf32> to vector<16x16xf32>
    %477 = vector.broadcast %61 : f32 to vector<16x16xf32>
    %478 = arith.mulf %477, %476 : vector<16x16xf32>
    %479 = arith.addf %453, %478 : vector<16x16xf32>
    %480 = vector.extract_strided_slice %462 {offsets = [2, 0], sizes = [16, 16], strides = [1, 1]} : vector<22x16xf32> to vector<16x16xf32>
    %481 = vector.broadcast %19 : f32 to vector<16x16xf32>
    %482 = arith.mulf %481, %480 : vector<16x16xf32>
    %483 = arith.addf %467, %482 : vector<16x16xf32>
    %484 = vector.extract_strided_slice %463 {offsets = [2, 0], sizes = [16, 16], strides = [1, 1]} : vector<22x16xf32> to vector<16x16xf32>
    %485 = vector.broadcast %68 : f32 to vector<16x16xf32>
    %486 = arith.mulf %485, %484 : vector<16x16xf32>
    %487 = arith.addf %471, %486 : vector<16x16xf32>
    %488 = vector.extract_strided_slice %462 {offsets = [3, 0], sizes = [16, 16], strides = [1, 1]} : vector<22x16xf32> to vector<16x16xf32>
    %489 = vector.broadcast %26 : f32 to vector<16x16xf32>
    %490 = arith.mulf %489, %488 : vector<16x16xf32>
    %491 = arith.addf %475, %490 : vector<16x16xf32>
    %492 = vector.extract_strided_slice %463 {offsets = [3, 0], sizes = [16, 16], strides = [1, 1]} : vector<22x16xf32> to vector<16x16xf32>
    %493 = vector.broadcast %75 : f32 to vector<16x16xf32>
    %494 = arith.mulf %493, %492 : vector<16x16xf32>
    %495 = arith.addf %479, %494 : vector<16x16xf32>
    %496 = vector.extract_strided_slice %462 {offsets = [4, 0], sizes = [16, 16], strides = [1, 1]} : vector<22x16xf32> to vector<16x16xf32>
    %497 = vector.broadcast %33 : f32 to vector<16x16xf32>
    %498 = arith.mulf %497, %496 : vector<16x16xf32>
    %499 = arith.addf %483, %498 : vector<16x16xf32>
    %500 = vector.extract_strided_slice %463 {offsets = [4, 0], sizes = [16, 16], strides = [1, 1]} : vector<22x16xf32> to vector<16x16xf32>
    %501 = vector.broadcast %82 : f32 to vector<16x16xf32>
    %502 = arith.mulf %501, %500 : vector<16x16xf32>
    %503 = arith.addf %487, %502 : vector<16x16xf32>
    %504 = vector.extract_strided_slice %462 {offsets = [5, 0], sizes = [16, 16], strides = [1, 1]} : vector<22x16xf32> to vector<16x16xf32>
    %505 = vector.broadcast %40 : f32 to vector<16x16xf32>
    %506 = arith.mulf %505, %504 : vector<16x16xf32>
    %507 = arith.addf %491, %506 : vector<16x16xf32>
    %508 = vector.extract_strided_slice %463 {offsets = [5, 0], sizes = [16, 16], strides = [1, 1]} : vector<22x16xf32> to vector<16x16xf32>
    %509 = vector.broadcast %89 : f32 to vector<16x16xf32>
    %510 = arith.mulf %509, %508 : vector<16x16xf32>
    %511 = arith.addf %495, %510 : vector<16x16xf32>
    %512 = vector.extract_strided_slice %462 {offsets = [6, 0], sizes = [16, 16], strides = [1, 1]} : vector<22x16xf32> to vector<16x16xf32>
    %513 = vector.broadcast %47 : f32 to vector<16x16xf32>
    %514 = arith.mulf %513, %512 : vector<16x16xf32>
    %515 = arith.addf %499, %514 : vector<16x16xf32>
    %516 = vector.extract_strided_slice %463 {offsets = [6, 0], sizes = [16, 16], strides = [1, 1]} : vector<22x16xf32> to vector<16x16xf32>
    %517 = vector.broadcast %96 : f32 to vector<16x16xf32>
    %518 = arith.mulf %517, %516 : vector<16x16xf32>
    %519 = arith.addf %503, %518 : vector<16x16xf32>
    %520 = vector.extract_strided_slice %153 {offsets = [0, 6], sizes = [22, 16], strides = [1, 1]} : vector<22x22xf32> to vector<22x16xf32>
    %521 = vector.extract_strided_slice %167 {offsets = [0, 6], sizes = [22, 16], strides = [1, 1]} : vector<22x22xf32> to vector<22x16xf32>
    %522 = vector.extract_strided_slice %520 {offsets = [0, 0], sizes = [16, 16], strides = [1, 1]} : vector<22x16xf32> to vector<16x16xf32>
    %523 = vector.broadcast %6 : f32 to vector<16x16xf32>
    %524 = arith.mulf %523, %522 : vector<16x16xf32>
    %525 = arith.addf %515, %524 : vector<16x16xf32>
    %526 = vector.extract_strided_slice %521 {offsets = [0, 0], sizes = [16, 16], strides = [1, 1]} : vector<22x16xf32> to vector<16x16xf32>
    %527 = vector.broadcast %55 : f32 to vector<16x16xf32>
    %528 = arith.mulf %527, %526 : vector<16x16xf32>
    %529 = arith.addf %519, %528 : vector<16x16xf32>
    %530 = vector.extract_strided_slice %520 {offsets = [1, 0], sizes = [16, 16], strides = [1, 1]} : vector<22x16xf32> to vector<16x16xf32>
    %531 = vector.broadcast %13 : f32 to vector<16x16xf32>
    %532 = arith.mulf %531, %530 : vector<16x16xf32>
    %533 = arith.addf %507, %532 : vector<16x16xf32>
    %534 = vector.extract_strided_slice %521 {offsets = [1, 0], sizes = [16, 16], strides = [1, 1]} : vector<22x16xf32> to vector<16x16xf32>
    %535 = vector.broadcast %62 : f32 to vector<16x16xf32>
    %536 = arith.mulf %535, %534 : vector<16x16xf32>
    %537 = arith.addf %511, %536 : vector<16x16xf32>
    %538 = vector.extract_strided_slice %520 {offsets = [2, 0], sizes = [16, 16], strides = [1, 1]} : vector<22x16xf32> to vector<16x16xf32>
    %539 = vector.broadcast %20 : f32 to vector<16x16xf32>
    %540 = arith.mulf %539, %538 : vector<16x16xf32>
    %541 = arith.addf %525, %540 : vector<16x16xf32>
    %542 = vector.extract_strided_slice %521 {offsets = [2, 0], sizes = [16, 16], strides = [1, 1]} : vector<22x16xf32> to vector<16x16xf32>
    %543 = vector.broadcast %69 : f32 to vector<16x16xf32>
    %544 = arith.mulf %543, %542 : vector<16x16xf32>
    %545 = arith.addf %529, %544 : vector<16x16xf32>
    %546 = vector.extract_strided_slice %520 {offsets = [3, 0], sizes = [16, 16], strides = [1, 1]} : vector<22x16xf32> to vector<16x16xf32>
    %547 = vector.broadcast %27 : f32 to vector<16x16xf32>
    %548 = arith.mulf %547, %546 : vector<16x16xf32>
    %549 = arith.addf %533, %548 : vector<16x16xf32>
    %550 = vector.extract_strided_slice %521 {offsets = [3, 0], sizes = [16, 16], strides = [1, 1]} : vector<22x16xf32> to vector<16x16xf32>
    %551 = vector.broadcast %76 : f32 to vector<16x16xf32>
    %552 = arith.mulf %551, %550 : vector<16x16xf32>
    %553 = arith.addf %537, %552 : vector<16x16xf32>
    %554 = vector.extract_strided_slice %520 {offsets = [4, 0], sizes = [16, 16], strides = [1, 1]} : vector<22x16xf32> to vector<16x16xf32>
    %555 = vector.broadcast %34 : f32 to vector<16x16xf32>
    %556 = arith.mulf %555, %554 : vector<16x16xf32>
    %557 = arith.addf %541, %556 : vector<16x16xf32>
    %558 = vector.extract_strided_slice %521 {offsets = [4, 0], sizes = [16, 16], strides = [1, 1]} : vector<22x16xf32> to vector<16x16xf32>
    %559 = vector.broadcast %83 : f32 to vector<16x16xf32>
    %560 = arith.mulf %559, %558 : vector<16x16xf32>
    %561 = arith.addf %545, %560 : vector<16x16xf32>
    %562 = vector.extract_strided_slice %520 {offsets = [5, 0], sizes = [16, 16], strides = [1, 1]} : vector<22x16xf32> to vector<16x16xf32>
    %563 = vector.broadcast %41 : f32 to vector<16x16xf32>
    %564 = arith.mulf %563, %562 : vector<16x16xf32>
    %565 = arith.addf %549, %564 : vector<16x16xf32>
    %566 = vector.extract_strided_slice %521 {offsets = [5, 0], sizes = [16, 16], strides = [1, 1]} : vector<22x16xf32> to vector<16x16xf32>
    %567 = vector.broadcast %90 : f32 to vector<16x16xf32>
    %568 = arith.mulf %567, %566 : vector<16x16xf32>
    %569 = arith.addf %553, %568 : vector<16x16xf32>
    %570 = vector.extract_strided_slice %520 {offsets = [6, 0], sizes = [16, 16], strides = [1, 1]} : vector<22x16xf32> to vector<16x16xf32>
    %571 = vector.broadcast %48 : f32 to vector<16x16xf32>
    %572 = arith.mulf %571, %570 : vector<16x16xf32>
    %573 = arith.addf %557, %572 : vector<16x16xf32>
    %574 = vector.extract_strided_slice %521 {offsets = [6, 0], sizes = [16, 16], strides = [1, 1]} : vector<22x16xf32> to vector<16x16xf32>
    %575 = vector.broadcast %97 : f32 to vector<16x16xf32>
    %576 = arith.mulf %575, %574 : vector<16x16xf32>
    %577 = arith.addf %561, %576 : vector<16x16xf32>
    %578 = arith.addf %573, %565 : vector<16x16xf32>
    %579 = arith.addf %577, %569 : vector<16x16xf32>
    %580 = arith.addf %578, %579 : vector<16x16xf32>
    %581 = arith.negf %580 : vector<16x16xf32>
    %582 = math.exp %581 : vector<16x16xf32>
    %cst_9 = arith.constant 1.000000e+00 : f32
    %583 = vector.broadcast %cst_9 : f32 to vector<16x16xf32>
    %584 = arith.addf %583, %582 : vector<16x16xf32>
    %585 = arith.divf %583, %584 : vector<16x16xf32>
    %586 = vector.extract_strided_slice %585 {offsets = [0, 0], sizes = [1, 16], strides = [1, 1]} : vector<16x16xf32> to vector<1x16xf32>
    %587 = vector.extract_strided_slice %585 {offsets = [1, 0], sizes = [1, 16], strides = [1, 1]} : vector<16x16xf32> to vector<1x16xf32>
    %588 = vector.extract_strided_slice %585 {offsets = [2, 0], sizes = [1, 16], strides = [1, 1]} : vector<16x16xf32> to vector<1x16xf32>
    %589 = vector.extract_strided_slice %585 {offsets = [3, 0], sizes = [1, 16], strides = [1, 1]} : vector<16x16xf32> to vector<1x16xf32>
    %590 = vector.extract_strided_slice %585 {offsets = [4, 0], sizes = [1, 16], strides = [1, 1]} : vector<16x16xf32> to vector<1x16xf32>
    %591 = vector.extract_strided_slice %585 {offsets = [5, 0], sizes = [1, 16], strides = [1, 1]} : vector<16x16xf32> to vector<1x16xf32>
    %592 = vector.extract_strided_slice %585 {offsets = [6, 0], sizes = [1, 16], strides = [1, 1]} : vector<16x16xf32> to vector<1x16xf32>
    %593 = vector.extract_strided_slice %585 {offsets = [7, 0], sizes = [1, 16], strides = [1, 1]} : vector<16x16xf32> to vector<1x16xf32>
    %594 = vector.extract_strided_slice %585 {offsets = [8, 0], sizes = [1, 16], strides = [1, 1]} : vector<16x16xf32> to vector<1x16xf32>
    %595 = vector.extract_strided_slice %585 {offsets = [9, 0], sizes = [1, 16], strides = [1, 1]} : vector<16x16xf32> to vector<1x16xf32>
    %596 = vector.extract_strided_slice %585 {offsets = [10, 0], sizes = [1, 16], strides = [1, 1]} : vector<16x16xf32> to vector<1x16xf32>
    %597 = vector.extract_strided_slice %585 {offsets = [11, 0], sizes = [1, 16], strides = [1, 1]} : vector<16x16xf32> to vector<1x16xf32>
    %598 = vector.extract_strided_slice %585 {offsets = [12, 0], sizes = [1, 16], strides = [1, 1]} : vector<16x16xf32> to vector<1x16xf32>
    %599 = vector.extract_strided_slice %585 {offsets = [13, 0], sizes = [1, 16], strides = [1, 1]} : vector<16x16xf32> to vector<1x16xf32>
    %600 = vector.extract_strided_slice %585 {offsets = [14, 0], sizes = [1, 16], strides = [1, 1]} : vector<16x16xf32> to vector<1x16xf32>
    %601 = vector.extract_strided_slice %585 {offsets = [15, 0], sizes = [1, 16], strides = [1, 1]} : vector<16x16xf32> to vector<1x16xf32>
    %602 = tpu.concatenate %586, %587, %588, %589, %590, %591, %592, %593, %594, %595, %596, %597, %598, %599, %600, %601 in 1 : vector<1x16xf32>, vector<1x16xf32>, vector<1x16xf32>, vector<1x16xf32>, vector<1x16xf32>, vector<1x16xf32>, vector<1x16xf32>, vector<1x16xf32>, vector<1x16xf32>, vector<1x16xf32>, vector<1x16xf32>, vector<1x16xf32>, vector<1x16xf32>, vector<1x16xf32>, vector<1x16xf32>, vector<1x16xf32> -> vector<1x256xf32>
    %c0_10 = arith.constant 0 : index
    %c0_11 = arith.constant 0 : index
    %c0_12 = arith.constant 0 : index
    %603 = vector.load %arg2[%c0_10, %c0_11, %c0_12] : memref<1x4x256xf32, #tpu.memory_space<vmem>>, vector<1x4x256xf32>
    %604 = vector.shape_cast %603 : vector<1x4x256xf32> to vector<4x256xf32>
    %605 = vector.broadcast %602 : vector<1x256xf32> to vector<4x256xf32>
    %606 = arith.mulf %604, %605 : vector<4x256xf32>
    %c0_13 = arith.constant 0 : index
    %c0_14 = arith.constant 0 : index
    %c0_15 = arith.constant 0 : index
    %607 = vector.load %arg3[%c0_13, %c0_14, %c0_15] : memref<1x4x256xf32, #tpu.memory_space<vmem>>, vector<1x4x256xf32>
    %608 = vector.shape_cast %607 : vector<1x4x256xf32> to vector<4x256xf32>
    %609 = vector.shape_cast %606 : vector<4x256xf32> to vector<1x4x256xf32>
    tpu.vector_store %arg3[%c0_13, %c0_14, %c0_15], %609 {strides = array<i32>} : memref<1x4x256xf32, #tpu.memory_space<vmem>>, vector<1x4x256xf32>,
    return
  }
  func.func @transform_0(%arg0: i32) -> i32 {
    %c0_i32 = arith.constant 0 : i32
    %c0_i32_0 = arith.constant 0 : i32
    return %c0_i32 : i32
  }
  func.func @transform_1(%arg0: i32) -> (i32, i32, i32) {
    %c0_i32 = arith.constant 0 : i32
    %c0_i32_0 = arith.constant 0 : i32
    %c0_i32_1 = arith.constant 0 : i32
    return %arg0, %c0_i32, %c0_i32_0 : i32, i32, i32
  }
  func.func @transform_2(%arg0: i32) -> (i32, i32, i32) {
    %c0_i32 = arith.constant 0 : i32
    %c0_i32_0 = arith.constant 0 : i32
    %c0_i32_1 = arith.constant 0 : i32
    return %arg0, %c0_i32, %c0_i32_0 : i32, i32, i32
  }
}

</mosaic_0001>

<llo_original>
// kernel: tpu_custom_call.1
$region0: #{tpu_custom_call.1}
  #allocation0 [shape = 'u32[]', space=smem, size = 0x4, offset = 0x4, fixed_abs, tag = 'smem constant byte address 0x4 - core index']
  #allocation1 [shape = 'u32[72,128]{1,0:T(1,128)}', space=vmem, size = 0x9000, scoped, tag = 'internal scratch']
  %s0 = inlined_call_operand.hbm [shape: f32[98], index: 0, kind: input, shape index: {}]
  %s1 = inlined_call_operand.hbm [shape: f32[2,4,256], index: 1, kind: input, shape index: {}]
  %s2 = inlined_call_operand.hbm [shape: f32[2,4,256], index: 2, kind: output, shape index: {}]
  %s3 = sld [smem:[#allocation0]]
  $region49: #{tpu_custom_call.1} parent=0
    _
  %s5 = ssub.s32 1, %s3
  %s6 = scalar_select 0, %s5, %s3
  $region1: #{tpu_custom_call.1} parent=0
    #allocation2 [shape = 'u8[512]{0}', space=smem, size = 0x200, scoped, tag = 'input window, operand 0, single buffered']
    #allocation3 [shape = 's32[2]{0}', space=sflag, size = 0x8, scoped, tag = 'scoped memory for tpu_custom_call.1']
    #allocation4 [shape = 's32[2]{0}', space=sflag, size = 0x8, scoped, tag = 'scoped memory for tpu_custom_call.1']
    #allocation5 [shape = 's32[2]{0}', space=sflag, size = 0x8, scoped, tag = 'scoped memory for tpu_custom_call.1']
    #allocation6 [shape = 'u8[8192]{0}', space=vmem, size = 0x2000, scoped, tag = 'input window, operand 1']
    #allocation7 [shape = 'u8[8192]{0}', space=vmem, size = 0x2000, scoped, tag = 'output window, operand 0']
    %7 = vsyncpa [#allocation5], 0
    %8 = vsyncpa [#allocation3], 0
    %s9 = scalar_lea.sflag [#allocation3], 1
    %10 = vsyncpa %s9, 0
    %11 = vsyncpa [#allocation4], 0
    %s12 = scalar_lea.sflag [#allocation4], 1
    %13 = vsyncpa %s12, 0
    loop: start=0, step=1, limit=4
    $region2: #{tpu_custom_call.1} parent=1 // loop_pre_header
      _
    $region3: #{tpu_custom_call.1} parent=1 // loop_header
      %s15 = sphi 0, %s19
      %p16 = scmp.ge.s32.totalorder %s15, 4
      %s23 = sphi 0, %s23
      %s25 = sphi 0, %s23
      %s26 = sphi 0, %s25
      %s40 = sphi 0, %s26
      %s46 = sphi 0, %s48
      %s49 = sphi 0, %s46
      %s50 = sphi 0, %s49
      %s66 = sphi 0, %s50
      %s72 = sphi 0, %s74
      %s75 = sphi 0, %s72
      %s76 = sphi 0, %s75
      %s92 = sphi 0, %s76
    $region4: #{tpu_custom_call.1} parent=1 // loop_header_branch
      %18 = sbr.rel (%p16) target = $region8
    $region5: #{tpu_custom_call.1} parent=1 // loop_body
      %s20 = ssub.s32 %s15, 1
      %s21 = ssub.s32 %s15, 2
      %s22 = sadd.s32 %s15, 1
      %s24 = sadd.s32 %s23, 1
      %p27 = scmp.eq.s32.totalorder %s15, 1
      %p28 = scmp.ne.s32.totalorder %s23, %s25
      %p29 = scmp.eq.s32.totalorder %s15, 0
      %p30 = por %p28, %p29
      %p31 = scmp.ne.s32.totalorder %s23, %s25
      %p32 = scmp.eq.s32.totalorder %s20, 1
      %p33 = por %p31, %p32
      %p34 = scmp.ne.s32.totalorder %s25, %s26
      %p35 = scmp.eq.s32.totalorder %s20, 0
      %p36 = por %p34, %p35
      %p37 = scmp.ne.s32.totalorder %s25, %s26
      %p38 = scmp.eq.s32.totalorder %s21, 1
      %p39 = por %p37, %p38
      %p41 = scmp.ne.s32.totalorder %s26, %s40
      %p42 = scmp.eq.s32.totalorder %s21, 0
      %p43 = por %p41, %p42
      %s44 = ssub.s32 %s15, %s22
      %p45 = scmp.eq.s32.totalorder %s44, 0
      %s47 = sadd.s32 %s46, 1
      %s48 = scalar_select %p45, %s46, %s47
      %p51 = pneg %p45
      %p52 = scmp.eq.s32.totalorder %s15, 1
      %p53 = por %p51, %p52
      %p54 = scmp.ne.s32.totalorder %s46, %s49
      %p55 = scmp.eq.s32.totalorder %s15, 0
      %p56 = por %p54, %p55
      %p57 = scmp.ne.s32.totalorder %s46, %s49
      %p58 = scmp.eq.s32.totalorder %s20, 1
      %p59 = por %p57, %p58
      %p60 = scmp.ne.s32.totalorder %s49, %s50
      %p61 = scmp.eq.s32.totalorder %s20, 0
      %p62 = por %p60, %p61
      %p63 = scmp.ne.s32.totalorder %s49, %s50
      %p64 = scmp.eq.s32.totalorder %s21, 1
      %p65 = por %p63, %p64
      %p67 = scmp.ne.s32.totalorder %s50, %s66
      %p68 = scmp.eq.s32.totalorder %s21, 0
      %p69 = por %p67, %p68
      %s70 = ssub.s32 %s15, %s22
      %p71 = scmp.eq.s32.totalorder %s70, 0
      %s73 = sadd.s32 %s72, 1
      %s74 = scalar_select %p71, %s72, %s73
      %p77 = pneg %p71
      %p78 = scmp.eq.s32.totalorder %s15, 1
      %p79 = por %p77, %p78
      %p80 = scmp.ne.s32.totalorder %s72, %s75
      %p81 = scmp.eq.s32.totalorder %s15, 0
      %p82 = por %p80, %p81
      %p83 = scmp.ne.s32.totalorder %s72, %s75
      %p84 = scmp.eq.s32.totalorder %s20, 1
      %p85 = por %p83, %p84
      %p86 = scmp.ne.s32.totalorder %s75, %s76
      %p87 = scmp.eq.s32.totalorder %s20, 0
      %p88 = por %p86, %p87
      %p89 = scmp.ne.s32.totalorder %s75, %s76
      %p90 = scmp.eq.s32.totalorder %s21, 1
      %p91 = por %p89, %p90
      %p93 = scmp.ne.s32.totalorder %s76, %s92
      %p94 = scmp.eq.s32.totalorder %s21, 0
      %p95 = por %p93, %p94
      %p96 = scmp.le.s32.totalorder 1, %s15
      %p97 = scmp.lt.s32.totalorder %s15, 3
      %p98 = pnand %p96, %p97
      %p99 = pneg %p98
      // Predicated region
      $region9: #{tpu_custom_call.1} parent=5 // pred_check
        _
      $region10: #{tpu_custom_call.1} parent=5 // pred_check_branch
        %101 = sbr.rel (%p98) target = $region12
      $region11: #{tpu_custom_call.1} parent=5 // pred_region
        %s102 = ssub.s32 %s15, 1
        // Predicated region
        $region13: #{tpu_custom_call.1} parent=11 // pred_check
          %p103 = pneg %p36
        $region14: #{tpu_custom_call.1} parent=11 // pred_check_branch
          %105 = sbr.rel (%p103) target = $region16
        $region15: #{tpu_custom_call.1} parent=11 // pred_region
          %107 = vsyncadd [#allocation5], 0
          %s109 = sshll.u32 %s0, 4
          %s110 = int_to_ptr.hbm [resolvable:$true] %s109
          %112 = dma.hbm_to_smem %s110, 16, [#allocation2], [#allocation5]
        $region16: #{tpu_custom_call.1} parent=11 // pred_fallthru
          _
      $region12: #{tpu_custom_call.1} parent=5 // pred_fallthru
        _
      %p113 = scmp.lt.s32.totalorder %s15, 2
      // Predicated region
      $region17: #{tpu_custom_call.1} parent=5 // pred_check
        %p114 = pneg %p113
      $region18: #{tpu_custom_call.1} parent=5 // pred_check_branch
        %116 = sbr.rel (%p114) target = $region20
      $region19: #{tpu_custom_call.1} parent=5 // pred_region
        // Predicated region
        $region21: #{tpu_custom_call.1} parent=19 // pred_check
          %p117 = pneg %p56
        $region22: #{tpu_custom_call.1} parent=19 // pred_check_branch
          %119 = sbr.rel (%p117) target = $region24
        $region23: #{tpu_custom_call.1} parent=19 // pred_region
          %s120 = sand.u32 %s46, 1
          %s121 = scalar_lea.sflag [#allocation3], %s120
          %s122 = sand.u32 %s46, 1
          %s123 = smul.addr %s122, 8
          %s124 = scalar_lea.vmem [#allocation6], %s123
          %126 = vsyncadd %s121, 0
          %s127 = smul.addr %s15, 2
          %s128 = smul.addr %s127, 4
          %s129 = scalar_lea.hbm %s1, %s128
          %s131 = sshll.u32 %s129, 4
          %s132 = int_to_ptr.hbm [resolvable:$true] %s131
          %s133 = sshll.u32 %s124, 4
          %s134 = int_to_ptr.vmem [resolvable:$true] %s133
          %136 = dma.hbm_to_vmem [thread:$0]  %s132, 128, %s134, %s121
        $region24: #{tpu_custom_call.1} parent=19 // pred_fallthru
          _
      $region20: #{tpu_custom_call.1} parent=5 // pred_fallthru
        _
      %p137 = scmp.le.s32.totalorder 1, %s15
      %p138 = scmp.lt.s32.totalorder %s15, 3
      %p139 = pnand %p137, %p138
      %p140 = pneg %p139
      // Predicated region
      $region25: #{tpu_custom_call.1} parent=5 // pred_check
        _
      $region26: #{tpu_custom_call.1} parent=5 // pred_check_branch
        %142 = sbr.rel (%p139) target = $region28
      $region27: #{tpu_custom_call.1} parent=5 // pred_region
        %s143 = ssub.s32 %s15, 1
        // Predicated region
        $region29: #{tpu_custom_call.1} parent=27 // pred_check
          %p144 = pneg %p36
        $region30: #{tpu_custom_call.1} parent=27 // pred_check_branch
          %146 = sbr.rel (%p144) target = $region32
        $region31: #{tpu_custom_call.1} parent=27 // pred_region
          %148 = dma.done [#allocation5], 16
        $region32: #{tpu_custom_call.1} parent=27 // pred_fallthru
          _
        %s149 = sand.u32 %s49, 1
        %s150 = scalar_lea.sflag [#allocation3], %s149
        %s151 = sand.u32 %s49, 1
        %s152 = smul.addr %s151, 8
        %s153 = scalar_lea.vmem [#allocation6], %s152
        // Predicated region
        $region33: #{tpu_custom_call.1} parent=27 // pred_check
          %p154 = pneg %p62
        $region34: #{tpu_custom_call.1} parent=27 // pred_check_branch
          %156 = sbr.rel (%p154) target = $region36
        $region35: #{tpu_custom_call.1} parent=27 // pred_region
          %158 = dma.done %s150, 128
        $region36: #{tpu_custom_call.1} parent=27 // pred_fallthru
          _
        %159 = sfence
        %p160 = pneg %p36
        %p161 = pneg %p33
        %s162 = sand.u32 %s49, 1
        %s163 = scalar_lea.sflag [#allocation3], %s162
        %s164 = sand.u32 %s49, 1
        %s165 = smul.addr %s164, 8
        %s166 = scalar_lea.vmem [#allocation6], %s165
        %p167 = pneg %p62
        %p168 = pneg %p59
        %p169 = pneg %p88
        %p170 = pneg %p85
        %s171 = sand.u32 %s75, 1
        %s172 = scalar_lea.sflag [#allocation4], %s171
        %s173 = sand.u32 %s75, 1
        %s174 = smul.addr %s173, 8
        %s175 = scalar_lea.vmem [#allocation7], %s174
        %s176 = sld [smem:[#allocation2]]
        %s177 = sld [smem:[#allocation2 + $0x1]]
        %s178 = sld [smem:[#allocation2 + $0x2]]
        %s179 = sld [smem:[#allocation2 + $0x3]]
        %s180 = sld [smem:[#allocation2 + $0x4]]
        %s181 = sld [smem:[#allocation2 + $0x5]]
        %s182 = sld [smem:[#allocation2 + $0x6]]
        %s183 = sld [smem:[#allocation2 + $0x7]]
        %s184 = sld [smem:[#allocation2 + $0x8]]
        %s185 = sld [smem:[#allocation2 + $0x9]]
        %s186 = sld [smem:[#allocation2 + $0xa]]
        %s187 = sld [smem:[#allocation2 + $0xb]]
        %s188 = sld [smem:[#allocation2 + $0xc]]
        %s189 = sld [smem:[#allocation2 + $0xd]]
        %s190 = sld [smem:[#allocation2 + $0xe]]
        %s191 = sld [smem:[#allocation2 + $0xf]]
        %s192 = sld [smem:[#allocation2 + $0x10]]
        %s193 = sld [smem:[#allocation2 + $0x11]]
        %s194 = sld [smem:[#allocation2 + $0x12]]
        %s195 = sld [smem:[#allocation2 + $0x13]]
        %s196 = sld [smem:[#allocation2 + $0x14]]
        %s197 = sld [smem:[#allocation2 + $0x15]]
        %s198 = sld [smem:[#allocation2 + $0x16]]
        %s199 = sld [smem:[#allocation2 + $0x17]]
        %s200 = sld [smem:[#allocation2 + $0x18]]
        %s201 = sld [smem:[#allocation2 + $0x19]]
        %s202 = sld [smem:[#allocation2 + $0x1a]]
        %s203 = sld [smem:[#allocation2 + $0x1b]]
        %s204 = sld [smem:[#allocation2 + $0x1c]]
        %s205 = sld [smem:[#allocation2 + $0x1d]]
        %s206 = sld [smem:[#allocation2 + $0x1e]]
        %s207 = sld [smem:[#allocation2 + $0x1f]]
        %s208 = sld [smem:[#allocation2 + $0x20]]
        %s209 = sld [smem:[#allocation2 + $0x21]]
        %s210 = sld [smem:[#allocation2 + $0x22]]
        %s211 = sld [smem:[#allocation2 + $0x23]]
        %s212 = sld [smem:[#allocation2 + $0x24]]
        %s213 = sld [smem:[#allocation2 + $0x25]]
        %s214 = sld [smem:[#allocation2 + $0x26]]
        %s215 = sld [smem:[#allocation2 + $0x27]]
        %s216 = sld [smem:[#allocation2 + $0x28]]
        %s217 = sld [smem:[#allocation2 + $0x29]]
        %s218 = sld [smem:[#allocation2 + $0x2a]]
        %s219 = sld [smem:[#allocation2 + $0x2b]]
        %s220 = sld [smem:[#allocation2 + $0x2c]]
        %s221 = sld [smem:[#allocation2 + $0x2d]]
        %s222 = sld [smem:[#allocation2 + $0x2e]]
        %s223 = sld [smem:[#allocation2 + $0x2f]]
        %s224 = sld [smem:[#allocation2 + $0x30]]
        %s225 = sld [smem:[#allocation2 + $0x31]]
        %s226 = sld [smem:[#allocation2 + $0x32]]
        %s227 = sld [smem:[#allocation2 + $0x33]]
        %s228 = sld [smem:[#allocation2 + $0x34]]
        %s229 = sld [smem:[#allocation2 + $0x35]]
        %s230 = sld [smem:[#allocation2 + $0x36]]
        %s231 = sld [smem:[#allocation2 + $0x37]]
        %s232 = sld [smem:[#allocation2 + $0x38]]
        %s233 = sld [smem:[#allocation2 + $0x39]]
        %s234 = sld [smem:[#allocation2 + $0x3a]]
        %s235 = sld [smem:[#allocation2 + $0x3b]]
        %s236 = sld [smem:[#allocation2 + $0x3c]]
        %s237 = sld [smem:[#allocation2 + $0x3d]]
        %s238 = sld [smem:[#allocation2 + $0x3e]]
        %s239 = sld [smem:[#allocation2 + $0x3f]]
        %s240 = sld [smem:[#allocation2 + $0x40]]
        %s241 = sld [smem:[#allocation2 + $0x41]]
        %s242 = sld [smem:[#allocation2 + $0x42]]
        %s243 = sld [smem:[#allocation2 + $0x43]]
        %s244 = sld [smem:[#allocation2 + $0x44]]
        %s245 = sld [smem:[#allocation2 + $0x45]]
        %s246 = sld [smem:[#allocation2 + $0x46]]
        %s247 = sld [smem:[#allocation2 + $0x47]]
        %s248 = sld [smem:[#allocation2 + $0x48]]
        %s249 = sld [smem:[#allocation2 + $0x49]]
        %s250 = sld [smem:[#allocation2 + $0x4a]]
        %s251 = sld [smem:[#allocation2 + $0x4b]]
        %s252 = sld [smem:[#allocation2 + $0x4c]]
        %s253 = sld [smem:[#allocation2 + $0x4d]]
        %s254 = sld [smem:[#allocation2 + $0x4e]]
        %s255 = sld [smem:[#allocation2 + $0x4f]]
        %s256 = sld [smem:[#allocation2 + $0x50]]
        %s257 = sld [smem:[#allocation2 + $0x51]]
        %s258 = sld [smem:[#allocation2 + $0x52]]
        %s259 = sld [smem:[#allocation2 + $0x53]]
        %s260 = sld [smem:[#allocation2 + $0x54]]
        %s261 = sld [smem:[#allocation2 + $0x55]]
        %s262 = sld [smem:[#allocation2 + $0x56]]
        %s263 = sld [smem:[#allocation2 + $0x57]]
        %s264 = sld [smem:[#allocation2 + $0x58]]
        %s265 = sld [smem:[#allocation2 + $0x59]]
        %s266 = sld [smem:[#allocation2 + $0x5a]]
        %s267 = sld [smem:[#allocation2 + $0x5b]]
        %s268 = sld [smem:[#allocation2 + $0x5c]]
        %s269 = sld [smem:[#allocation2 + $0x5d]]
        %s270 = sld [smem:[#allocation2 + $0x5e]]
        %s271 = sld [smem:[#allocation2 + $0x5f]]
        %s272 = sld [smem:[#allocation2 + $0x60]]
        %s273 = sld [smem:[#allocation2 + $0x61]]
        %v274 = vld [vmem:[%s153] sm:$0xff]
        %276 = vst [vmem:[#allocation1] ss:$2 sm:$0xff] %v274
        %v277 = vld.sshfl [vmem:[#allocation1] sm:$0xff pattern:$0x75316420]
        %v278 = vld.sshfl [vmem:[#allocation1 + $0x8] sm:$0xff pattern:$0x75316420]
        %vm281 = vcmask 1043456
        %v282 = vsel %vm281, %v277, 0.0
        %v283 = vrot.slane %v282, 4
        %v284 = vadd.f32 %v282, %v283
        %v285 = vrot.slane %v284, 2
        %v286 = vadd.f32 %v284, %v285
        %v287 = vrot.slane %v286, 1
        %v288 = vadd.f32 %v286, %v287
        %v289 = vsel %vm281, %v278, 0.0
        %v290 = vrot.slane %v289, 4
        %v291 = vadd.f32 %v289, %v290
        %v292 = vrot.slane %v291, 2
        %v293 = vadd.f32 %v291, %v292
        %v294 = vrot.slane %v293, 1
        %v295 = vadd.f32 %v293, %v294
        %296 = vst [vmem:[#allocation1] ss:$2 sm:$0xff] %v274
        %v297 = vld.sshfl [vmem:[#allocation1] sm:$0xff pattern:$0x75316420]
        %v298 = vld.sshfl [vmem:[#allocation1 + $0x8] sm:$0xff pattern:$0x75316420]
        %v301 = vsel %vm281, %v297, -inf
        %v302 = vrot.slane %v301, 4
        %v303 = vmax.f32 %v301, %v302
        %v304 = vrot.slane %v303, 2
        %v305 = vmax.f32 %v303, %v304
        %v306 = vrot.slane %v305, 1
        %v307 = vmax.f32 %v305, %v306
        %v308 = vsel %vm281, %v298, -inf
        %v309 = vrot.slane %v308, 4
        %v310 = vmax.f32 %v308, %v309
        %v311 = vrot.slane %v310, 2
        %v312 = vmax.f32 %v310, %v311
        %v313 = vrot.slane %v312, 1
        %v314 = vmax.f32 %v312, %v313
        %v315 = vmul.f32 %v288, 0.25
        %v316 = vmul.f32 %v295, 0.25
        %318 = vrot.lane.b32.xlu0 %v315, 112
        %v319 = vpop.permute.xlu0 %318
        %321 = vrot.lane.b32.xlu0 %v315, 96
        %v322 = vpop.permute.xlu0 %321
        %324 = vrot.lane.b32.xlu0 %v315, 80
        %v325 = vpop.permute.xlu0 %324
        %327 = vrot.lane.b32.xlu0 %v315, 64
        %v328 = vpop.permute.xlu0 %327
        %330 = vrot.lane.b32.xlu0 %v315, 48
        %v331 = vpop.permute.xlu0 %330
        %333 = vrot.lane.b32.xlu0 %v315, 32
        %v334 = vpop.permute.xlu0 %333
        %336 = vrot.lane.b32.xlu0 %v315, 16
        %v337 = vpop.permute.xlu0 %336
        %340 = vrot.lane.b32.xlu0 %v316, 112
        %v341 = vpop.permute.xlu0 %340
        %343 = vrot.lane.b32.xlu0 %v316, 96
        %v344 = vpop.permute.xlu0 %343
        %346 = vrot.lane.b32.xlu0 %v316, 80
        %v347 = vpop.permute.xlu0 %346
        %349 = vrot.lane.b32.xlu0 %v316, 64
        %v350 = vpop.permute.xlu0 %349
        %352 = vrot.lane.b32.xlu0 %v316, 48
        %v353 = vpop.permute.xlu0 %352
        %355 = vrot.lane.b32.xlu0 %v316, 32
        %v356 = vpop.permute.xlu0 %355
        %358 = vrot.lane.b32.xlu0 %v316, 16
        %v359 = vpop.permute.xlu0 %358
        %vm361 = vcmask 1040384
        %v362 = vsel %vm361, %v315, %v319
        %vm363 = vcmask 1041408
        %v364 = vsel %vm363, %v362, %v322
        %vm365 = vcmask 1042432
        %v366 = vsel %vm365, %v364, %v325
        %v367 = vsel %vm281, %v366, %v328
        %vm368 = vcmask 1044480
        %v369 = vsel %vm368, %v367, %v331
        %vm370 = vcmask 1045504
        %v371 = vsel %vm370, %v369, %v334
        %vm372 = vcmask 1046528
        %v373 = vsel %vm372, %v371, %v337
        %v374 = vsel %vm361, %v316, %v341
        %v375 = vsel %vm363, %v374, %v344
        %v376 = vsel %vm365, %v375, %v347
        %v377 = vsel %vm281, %v376, %v350
        %v378 = vsel %vm368, %v377, %v353
        %v379 = vsel %vm370, %v378, %v356
        %v380 = vsel %vm372, %v379, %v359
        %382 = vrot.lane.b32.xlu0 %v307, 112
        %v383 = vpop.permute.xlu0 %382
        %385 = vrot.lane.b32.xlu0 %v307, 96
        %v386 = vpop.permute.xlu0 %385
        %388 = vrot.lane.b32.xlu0 %v307, 80
        %v389 = vpop.permute.xlu0 %388
        %391 = vrot.lane.b32.xlu0 %v307, 64
        %v392 = vpop.permute.xlu0 %391
        %394 = vrot.lane.b32.xlu0 %v307, 48
        %v395 = vpop.permute.xlu0 %394
        %397 = vrot.lane.b32.xlu0 %v307, 32
        %v398 = vpop.permute.xlu0 %397
        %400 = vrot.lane.b32.xlu0 %v307, 16
        %v401 = vpop.permute.xlu0 %400
        %404 = vrot.lane.b32.xlu0 %v314, 112
        %v405 = vpop.permute.xlu0 %404
        %407 = vrot.lane.b32.xlu0 %v314, 96
        %v408 = vpop.permute.xlu0 %407
        %410 = vrot.lane.b32.xlu0 %v314, 80
        %v411 = vpop.permute.xlu0 %410
        %413 = vrot.lane.b32.xlu0 %v314, 64
        %v414 = vpop.permute.xlu0 %413
        %416 = vrot.lane.b32.xlu0 %v314, 48
        %v417 = vpop.permute.xlu0 %416
        %419 = vrot.lane.b32.xlu0 %v314, 32
        %v420 = vpop.permute.xlu0 %419
        %422 = vrot.lane.b32.xlu0 %v314, 16
        %v423 = vpop.permute.xlu0 %422
        %v425 = vsel %vm361, %v307, %v383
        %v426 = vsel %vm363, %v425, %v386
        %v427 = vsel %vm365, %v426, %v389
        %v428 = vsel %vm281, %v427, %v392
        %v429 = vsel %vm368, %v428, %v395
        %v430 = vsel %vm370, %v429, %v398
        %v431 = vsel %vm372, %v430, %v401
        %v432 = vsel %vm361, %v314, %v405
        %v433 = vsel %vm363, %v432, %v408
        %v434 = vsel %vm365, %v433, %v411
        %v435 = vsel %vm281, %v434, %v414
        %v436 = vsel %vm368, %v435, %v417
        %v437 = vsel %vm370, %v436, %v420
        %v438 = vsel %vm372, %v437, %v423
        %v440 = vrot.slane %v373, 3
        %v442 = vrot.slane %v373, 1
        %v444 = vrot.slane %v373, 7
        %v447 = vrot.slane %v373, 5
        %v448 = vrot.slane %v380, 5
        %v449 = vsel %vm365, %v447, %v448
        %v452 = vrot.slane %v380, 3
        %v454 = vrot.slane %v380, 1
        %v456 = vrot.slane %v380, 7
        %v458 = vsel %vm361, %v440, %v442
        %v459 = vsel %vm363, %v458, %v444
        %v460 = vsel %vm365, %v459, %v447
        %v461 = vsel %vm365, %v448, %v452
        %v462 = vsel %vm281, %v461, %v454
        %v463 = vsel %vm368, %v462, %v456
        %466 = vrot.lane.b32.xlu0 %v460, 125
        %v467 = vpop.permute.xlu0 %466
        %468 = vrot.lane.b32.xlu0 %v449, 125
        %v469 = vpop.permute.xlu0 %468
        %470 = vrot.lane.b32.xlu0 %v463, 125
        %v471 = vpop.permute.xlu0 %470
        %475 = vrot.lane.b32.xlu0 %v460, 127
        %v476 = vpop.permute.xlu0 %475
        %477 = vrot.lane.b32.xlu0 %v449, 127
        %v478 = vpop.permute.xlu0 %477
        %479 = vrot.lane.b32.xlu0 %v463, 127
        %v480 = vpop.permute.xlu0 %479
        %484 = vrot.lane.b32.xlu0 %v460, 1
        %v485 = vpop.permute.xlu0 %484
        %486 = vrot.lane.b32.xlu0 %v449, 1
        %v487 = vpop.permute.xlu0 %486
        %488 = vrot.lane.b32.xlu0 %v463, 1
        %v489 = vpop.permute.xlu0 %488
        %493 = vrot.lane.b32.xlu0 %v460, 3
        %v494 = vpop.permute.xlu0 %493
        %495 = vrot.lane.b32.xlu0 %v449, 3
        %v496 = vpop.permute.xlu0 %495
        %497 = vrot.lane.b32.xlu0 %v463, 3
        %v498 = vpop.permute.xlu0 %497
        %502 = vrot.lane.b32.xlu0 %v460, 5
        %v503 = vpop.permute.xlu0 %502
        %504 = vrot.lane.b32.xlu0 %v449, 5
        %v505 = vpop.permute.xlu0 %504
        %506 = vrot.lane.b32.xlu0 %v463, 5
        %v507 = vpop.permute.xlu0 %506
        %511 = vrot.lane.b32.xlu0 %v460, 7
        %v512 = vpop.permute.xlu0 %511
        %513 = vrot.lane.b32.xlu0 %v449, 7
        %v514 = vpop.permute.xlu0 %513
        %515 = vrot.lane.b32.xlu0 %v463, 7
        %v516 = vpop.permute.xlu0 %515
        %520 = vrot.lane.b32.xlu0 %v460, 9
        %v521 = vpop.permute.xlu0 %520
        %522 = vrot.lane.b32.xlu0 %v449, 9
        %v523 = vpop.permute.xlu0 %522
        %524 = vrot.lane.b32.xlu0 %v463, 9
        %v525 = vpop.permute.xlu0 %524
        %vm529 = vcmask 7168
        %v530 = vsel %vm529, %v467, %v476
        %v531 = vsel %vm529, %v469, %v478
        %v532 = vsel %vm529, %v471, %v480
        %vm533 = vcmask 15360
        %v534 = vsel %vm533, %v530, %v485
        %v535 = vsel %vm533, %v531, %v487
        %v536 = vsel %vm533, %v532, %v489
        %vm537 = vcmask 23552
        %v538 = vsel %vm537, %v534, %v494
        %v539 = vsel %vm537, %v535, %v496
        %v540 = vsel %vm537, %v536, %v498
        %vm541 = vcmask 154624
        %v542 = vsel %vm541, %v538, %v503
        %v543 = vsel %vm541, %v539, %v505
        %v544 = vsel %vm541, %v540, %v507
        %vm545 = vcmask 162816
        %v546 = vsel %vm545, %v542, %v512
        %v547 = vsel %vm545, %v543, %v514
        %v548 = vsel %vm545, %v544, %v516
        %vm549 = vcmask 171008
        %v550 = vsel %vm549, %v546, %v521
        %v551 = vsel %vm549, %v547, %v523
        %v552 = vsel %vm549, %v548, %v525
        %v554 = vrot.slane %v431, 3
        %v556 = vrot.slane %v431, 1
        %v558 = vrot.slane %v431, 7
        %v561 = vrot.slane %v431, 5
        %v562 = vrot.slane %v438, 5
        %v563 = vsel %vm365, %v561, %v562
        %v566 = vrot.slane %v438, 3
        %v568 = vrot.slane %v438, 1
        %v570 = vrot.slane %v438, 7
        %v572 = vsel %vm361, %v554, %v556
        %v573 = vsel %vm363, %v572, %v558
        %v574 = vsel %vm365, %v573, %v561
        %v575 = vsel %vm365, %v562, %v566
        %v576 = vsel %vm281, %v575, %v568
        %v577 = vsel %vm368, %v576, %v570
        %580 = vrot.lane.b32.xlu0 %v574, 125
        %v581 = vpop.permute.xlu0 %580
        %582 = vrot.lane.b32.xlu0 %v563, 125
        %v583 = vpop.permute.xlu0 %582
        %584 = vrot.lane.b32.xlu0 %v577, 125
        %v585 = vpop.permute.xlu0 %584
        %589 = vrot.lane.b32.xlu0 %v574, 127
        %v590 = vpop.permute.xlu0 %589
        %591 = vrot.lane.b32.xlu0 %v563, 127
        %v592 = vpop.permute.xlu0 %591
        %593 = vrot.lane.b32.xlu0 %v577, 127
        %v594 = vpop.permute.xlu0 %593
        %598 = vrot.lane.b32.xlu0 %v574, 1
        %v599 = vpop.permute.xlu0 %598
        %600 = vrot.lane.b32.xlu0 %v563, 1
        %v601 = vpop.permute.xlu0 %600
        %602 = vrot.lane.b32.xlu0 %v577, 1
        %v603 = vpop.permute.xlu0 %602
        %607 = vrot.lane.b32.xlu0 %v574, 3
        %v608 = vpop.permute.xlu0 %607
        %609 = vrot.lane.b32.xlu0 %v563, 3
        %v610 = vpop.permute.xlu0 %609
        %611 = vrot.lane.b32.xlu0 %v577, 3
        %v612 = vpop.permute.xlu0 %611
        %616 = vrot.lane.b32.xlu0 %v574, 5
        %v617 = vpop.permute.xlu0 %616
        %618 = vrot.lane.b32.xlu0 %v563, 5
        %v619 = vpop.permute.xlu0 %618
        %620 = vrot.lane.b32.xlu0 %v577, 5
        %v621 = vpop.permute.xlu0 %620
        %625 = vrot.lane.b32.xlu0 %v574, 7
        %v626 = vpop.permute.xlu0 %625
        %627 = vrot.lane.b32.xlu0 %v563, 7
        %v628 = vpop.permute.xlu0 %627
        %629 = vrot.lane.b32.xlu0 %v577, 7
        %v630 = vpop.permute.xlu0 %629
        %634 = vrot.lane.b32.xlu0 %v574, 9
        %v635 = vpop.permute.xlu0 %634
        %636 = vrot.lane.b32.xlu0 %v563, 9
        %v637 = vpop.permute.xlu0 %636
        %638 = vrot.lane.b32.xlu0 %v577, 9
        %v639 = vpop.permute.xlu0 %638
        %v643 = vsel %vm529, %v581, %v590
        %v644 = vsel %vm529, %v583, %v592
        %v645 = vsel %vm529, %v585, %v594
        %v646 = vsel %vm533, %v643, %v599
        %v647 = vsel %vm533, %v644, %v601
        %v648 = vsel %vm533, %v645, %v603
        %v649 = vsel %vm537, %v646, %v608
        %v650 = vsel %vm537, %v647, %v610
        %v651 = vsel %vm537, %v648, %v612
        %v652 = vsel %vm541, %v649, %v617
        %v653 = vsel %vm541, %v650, %v619
        %v654 = vsel %vm541, %v651, %v621
        %v655 = vsel %vm545, %v652, %v626
        %v656 = vsel %vm545, %v653, %v628
        %v657 = vsel %vm545, %v654, %v630
        %v658 = vsel %vm549, %v655, %v635
        %v659 = vsel %vm549, %v656, %v637
        %v660 = vsel %vm549, %v657, %v639
        %v661 = vstv %s176
        %v662 = vmul.f32 %v661, %v550
        %v663 = vmul.f32 %v661, %v551
        %v664 = vadd.f32 %v662, 0.0
        %v665 = vadd.f32 %v663, 0.0
        %v666 = vstv %s225
        %v667 = vmul.f32 %v666, %v658
        %v668 = vmul.f32 %v666, %v659
        %v669 = vadd.f32 %v667, 0.0
        %v670 = vadd.f32 %v668, 0.0
        %v671 = vstv %s183
        %v672 = vmul.f32 %v671, %v550
        %v673 = vmul.f32 %v671, %v551
        %v674 = vmul.f32 %v671, %v552
        %v675 = vadd.f32 %v672, 0.0
        %v676 = vadd.f32 %v673, 0.0
        %v677 = vadd.f32 %v674, 0.0
        %v678 = vstv %s232
        %v679 = vmul.f32 %v678, %v658
        %v680 = vmul.f32 %v678, %v659
        %v681 = vmul.f32 %v678, %v660
        %v682 = vadd.f32 %v679, 0.0
        %v683 = vadd.f32 %v680, 0.0
        %v684 = vadd.f32 %v681, 0.0
        %v685 = vstv %s190
        %v686 = vmul.f32 %v685, %v550
        %v687 = vmul.f32 %v685, %v551
        %v688 = vmul.f32 %v685, %v552
        %v692 = vrot.slane %v686, 2
        %v693 = vrot.slane %v687, 2
        %v694 = vsel %vm370, %v692, %v693
        %v695 = vrot.slane %v688, 2
        %v696 = vsel %vm370, %v693, %v695
        %v699 = vadd.f32 %v664, %v694
        %v700 = vadd.f32 %v665, %v696
        %v701 = vstv %s239
        %v702 = vmul.f32 %v701, %v658
        %v703 = vmul.f32 %v701, %v659
        %v704 = vmul.f32 %v701, %v660
        %v708 = vrot.slane %v702, 2
        %v709 = vrot.slane %v703, 2
        %v710 = vsel %vm370, %v708, %v709
        %v711 = vrot.slane %v704, 2
        %v712 = vsel %vm370, %v709, %v711
        %v715 = vadd.f32 %v669, %v710
        %v716 = vadd.f32 %v670, %v712
        %v717 = vstv %s197
        %v718 = vmul.f32 %v717, %v550
        %v719 = vmul.f32 %v717, %v551
        %v720 = vmul.f32 %v717, %v552
        %v724 = vrot.slane %v718, 2
        %v725 = vrot.slane %v719, 2
        %v726 = vsel %vm370, %v724, %v725
        %v727 = vrot.slane %v720, 2
        %v728 = vsel %vm370, %v725, %v727
        %v732 = vadd.f32 %v675, %v726
        %v733 = vadd.f32 %v676, %v728
        %v734 = vadd.f32 %v677, %v727
        %v735 = vstv %s246
        %v736 = vmul.f32 %v735, %v658
        %v737 = vmul.f32 %v735, %v659
        %v738 = vmul.f32 %v735, %v660
        %v742 = vrot.slane %v736, 2
        %v743 = vrot.slane %v737, 2
        %v744 = vsel %vm370, %v742, %v743
        %v745 = vrot.slane %v738, 2
        %v746 = vsel %vm370, %v743, %v745
        %v750 = vadd.f32 %v682, %v744
        %v751 = vadd.f32 %v683, %v746
        %v752 = vadd.f32 %v684, %v745
        %v753 = vstv %s204
        %v754 = vmul.f32 %v753, %v550
        %v755 = vmul.f32 %v753, %v551
        %v756 = vmul.f32 %v753, %v552
        %v760 = vrot.slane %v754, 4
        %v761 = vrot.slane %v755, 4
        %v762 = vsel %vm281, %v760, %v761
        %v763 = vrot.slane %v756, 4
        %v764 = vsel %vm281, %v761, %v763
        %v767 = vadd.f32 %v699, %v762
        %v768 = vadd.f32 %v700, %v764
        %v769 = vstv %s253
        %v770 = vmul.f32 %v769, %v658
        %v771 = vmul.f32 %v769, %v659
        %v772 = vmul.f32 %v769, %v660
        %v776 = vrot.slane %v770, 4
        %v777 = vrot.slane %v771, 4
        %v778 = vsel %vm281, %v776, %v777
        %v779 = vrot.slane %v772, 4
        %v780 = vsel %vm281, %v777, %v779
        %v783 = vadd.f32 %v715, %v778
        %v784 = vadd.f32 %v716, %v780
        %v785 = vstv %s211
        %v786 = vmul.f32 %v785, %v550
        %v787 = vmul.f32 %v785, %v551
        %v788 = vmul.f32 %v785, %v552
        %v792 = vrot.slane %v786, 4
        %v793 = vrot.slane %v787, 4
        %v794 = vsel %vm281, %v792, %v793
        %v795 = vrot.slane %v788, 4
        %v796 = vsel %vm281, %v793, %v795
        %v800 = vadd.f32 %v732, %v794
        %v801 = vadd.f32 %v733, %v796
        %v802 = vadd.f32 %v734, %v795
        %v803 = vstv %s260
        %v804 = vmul.f32 %v803, %v658
        %v805 = vmul.f32 %v803, %v659
        %v806 = vmul.f32 %v803, %v660
        %v810 = vrot.slane %v804, 4
        %v811 = vrot.slane %v805, 4
        %v812 = vsel %vm281, %v810, %v811
        %v813 = vrot.slane %v806, 4
        %v814 = vsel %vm281, %v811, %v813
        %v818 = vadd.f32 %v750, %v812
        %v819 = vadd.f32 %v751, %v814
        %v820 = vadd.f32 %v752, %v813
        %v821 = vstv %s218
        %v822 = vmul.f32 %v821, %v550
        %v823 = vmul.f32 %v821, %v551
        %v824 = vmul.f32 %v821, %v552
        %v828 = vrot.slane %v822, 6
        %v829 = vrot.slane %v823, 6
        %v830 = vsel %vm363, %v828, %v829
        %v831 = vrot.slane %v824, 6
        %v832 = vsel %vm363, %v829, %v831
        %v835 = vadd.f32 %v767, %v830
        %v836 = vadd.f32 %v768, %v832
        %v837 = vstv %s267
        %v838 = vmul.f32 %v837, %v658
        %v839 = vmul.f32 %v837, %v659
        %v840 = vmul.f32 %v837, %v660
        %v844 = vrot.slane %v838, 6
        %v845 = vrot.slane %v839, 6
        %v846 = vsel %vm363, %v844, %v845
        %v847 = vrot.slane %v840, 6
        %v848 = vsel %vm363, %v845, %v847
        %v851 = vadd.f32 %v783, %v846
        %v852 = vadd.f32 %v784, %v848
        %v853 = vstv %s177
        %v854 = vmul.f32 %v853, %v550
        %v855 = vmul.f32 %v853, %v551
        %858 = vrot.lane.b32.xlu0 %v854, 127
        %v859 = vpop.permute.xlu0 %858
        %860 = vrot.lane.b32.xlu0 %v855, 127
        %v861 = vpop.permute.xlu0 %860
        %v864 = vadd.f32 %v835, %v859
        %v865 = vadd.f32 %v836, %v861
        %v866 = vstv %s226
        %v867 = vmul.f32 %v866, %v658
        %v868 = vmul.f32 %v866, %v659
        %871 = vrot.lane.b32.xlu0 %v867, 127
        %v872 = vpop.permute.xlu0 %871
        %873 = vrot.lane.b32.xlu0 %v868, 127
        %v874 = vpop.permute.xlu0 %873
        %v877 = vadd.f32 %v851, %v872
        %v878 = vadd.f32 %v852, %v874
        %v879 = vstv %s184
        %v880 = vmul.f32 %v879, %v550
        %v881 = vmul.f32 %v879, %v551
        %v882 = vmul.f32 %v879, %v552
        %886 = vrot.lane.b32.xlu0 %v880, 127
        %v887 = vpop.permute.xlu0 %886
        %888 = vrot.lane.b32.xlu0 %v881, 127
        %v889 = vpop.permute.xlu0 %888
        %890 = vrot.lane.b32.xlu0 %v882, 127
        %v891 = vpop.permute.xlu0 %890
        %v895 = vadd.f32 %v800, %v887
        %v896 = vadd.f32 %v801, %v889
        %v897 = vadd.f32 %v802, %v891
        %v898 = vstv %s233
        %v899 = vmul.f32 %v898, %v658
        %v900 = vmul.f32 %v898, %v659
        %v901 = vmul.f32 %v898, %v660
        %905 = vrot.lane.b32.xlu0 %v899, 127
        %v906 = vpop.permute.xlu0 %905
        %907 = vrot.lane.b32.xlu0 %v900, 127
        %v908 = vpop.permute.xlu0 %907
        %909 = vrot.lane.b32.xlu0 %v901, 127
        %v910 = vpop.permute.xlu0 %909
        %v914 = vadd.f32 %v818, %v906
        %v915 = vadd.f32 %v819, %v908
        %v916 = vadd.f32 %v820, %v910
        %v917 = vstv %s191
        %v918 = vmul.f32 %v917, %v550
        %v919 = vmul.f32 %v917, %v551
        %v920 = vmul.f32 %v917, %v552
        %v924 = vrot.slane %v918, 2
        %v925 = vrot.slane %v919, 2
        %v926 = vsel %vm370, %v924, %v925
        %v927 = vrot.slane %v920, 2
        %v928 = vsel %vm370, %v925, %v927
        %929 = vrot.lane.b32.xlu0 %v926, 127
        %v930 = vpop.permute.xlu0 %929
        %931 = vrot.lane.b32.xlu0 %v928, 127
        %v932 = vpop.permute.xlu0 %931
        %v935 = vadd.f32 %v864, %v930
        %v936 = vadd.f32 %v865, %v932
        %v937 = vstv %s240
        %v938 = vmul.f32 %v937, %v658
        %v939 = vmul.f32 %v937, %v659
        %v940 = vmul.f32 %v937, %v660
        %v944 = vrot.slane %v938, 2
        %v945 = vrot.slane %v939, 2
        %v946 = vsel %vm370, %v944, %v945
        %v947 = vrot.slane %v940, 2
        %v948 = vsel %vm370, %v945, %v947
        %949 = vrot.lane.b32.xlu0 %v946, 127
        %v950 = vpop.permute.xlu0 %949
        %951 = vrot.lane.b32.xlu0 %v948, 127
        %v952 = vpop.permute.xlu0 %951
        %v955 = vadd.f32 %v877, %v950
        %v956 = vadd.f32 %v878, %v952
        %v957 = vstv %s198
        %v958 = vmul.f32 %v957, %v550
        %v959 = vmul.f32 %v957, %v551
        %v960 = vmul.f32 %v957, %v552
        %v964 = vrot.slane %v958, 2
        %v965 = vrot.slane %v959, 2
        %v966 = vsel %vm370, %v964, %v965
        %v967 = vrot.slane %v960, 2
        %v968 = vsel %vm370, %v965, %v967
        %969 = vrot.lane.b32.xlu0 %v966, 127
        %v970 = vpop.permute.xlu0 %969
        %971 = vrot.lane.b32.xlu0 %v968, 127
        %v972 = vpop.permute.xlu0 %971
        %973 = vrot.lane.b32.xlu0 %v967, 127
        %v974 = vpop.permute.xlu0 %973
        %v978 = vadd.f32 %v895, %v970
        %v979 = vadd.f32 %v896, %v972
        %v980 = vadd.f32 %v897, %v974
        %v981 = vstv %s247
        %v982 = vmul.f32 %v981, %v658
        %v983 = vmul.f32 %v981, %v659
        %v984 = vmul.f32 %v981, %v660
        %v988 = vrot.slane %v982, 2
        %v989 = vrot.slane %v983, 2
        %v990 = vsel %vm370, %v988, %v989
        %v991 = vrot.slane %v984, 2
        %v992 = vsel %vm370, %v989, %v991
        %993 = vrot.lane.b32.xlu0 %v990, 127
        %v994 = vpop.permute.xlu0 %993
        %995 = vrot.lane.b32.xlu0 %v992, 127
        %v996 = vpop.permute.xlu0 %995
        %997 = vrot.lane.b32.xlu0 %v991, 127
        %v998 = vpop.permute.xlu0 %997
        %v1002 = vadd.f32 %v914, %v994
        %v1003 = vadd.f32 %v915, %v996
        %v1004 = vadd.f32 %v916, %v998
        %v1005 = vstv %s205
        %v1006 = vmul.f32 %v1005, %v550
        %v1007 = vmul.f32 %v1005, %v551
        %v1008 = vmul.f32 %v1005, %v552
        %v1012 = vrot.slane %v1006, 4
        %v1013 = vrot.slane %v1007, 4
        %v1014 = vsel %vm281, %v1012, %v1013
        %v1015 = vrot.slane %v1008, 4
        %v1016 = vsel %vm281, %v1013, %v1015
        %1017 = vrot.lane.b32.xlu0 %v1014, 127
        %v1018 = vpop.permute.xlu0 %1017
        %1019 = vrot.lane.b32.xlu0 %v1016, 127
        %v1020 = vpop.permute.xlu0 %1019
        %v1023 = vadd.f32 %v935, %v1018
        %v1024 = vadd.f32 %v936, %v1020
        %v1025 = vstv %s254
        %v1026 = vmul.f32 %v1025, %v658
        %v1027 = vmul.f32 %v1025, %v659
        %v1028 = vmul.f32 %v1025, %v660
        %v1032 = vrot.slane %v1026, 4
        %v1033 = vrot.slane %v1027, 4
        %v1034 = vsel %vm281, %v1032, %v1033
        %v1035 = vrot.slane %v1028, 4
        %v1036 = vsel %vm281, %v1033, %v1035
        %1037 = vrot.lane.b32.xlu0 %v1034, 127
        %v1038 = vpop.permute.xlu0 %1037
        %1039 = vrot.lane.b32.xlu0 %v1036, 127
        %v1040 = vpop.permute.xlu0 %1039
        %v1043 = vadd.f32 %v955, %v1038
        %v1044 = vadd.f32 %v956, %v1040
        %v1045 = vstv %s212
        %v1046 = vmul.f32 %v1045, %v550
        %v1047 = vmul.f32 %v1045, %v551
        %v1048 = vmul.f32 %v1045, %v552
        %v1052 = vrot.slane %v1046, 4
        %v1053 = vrot.slane %v1047, 4
        %v1054 = vsel %vm281, %v1052, %v1053
        %v1055 = vrot.slane %v1048, 4
        %v1056 = vsel %vm281, %v1053, %v1055
        %1057 = vrot.lane.b32.xlu0 %v1054, 127
        %v1058 = vpop.permute.xlu0 %1057
        %1059 = vrot.lane.b32.xlu0 %v1056, 127
        %v1060 = vpop.permute.xlu0 %1059
        %1061 = vrot.lane.b32.xlu0 %v1055, 127
        %v1062 = vpop.permute.xlu0 %1061
        %v1066 = vadd.f32 %v978, %v1058
        %v1067 = vadd.f32 %v979, %v1060
        %v1068 = vadd.f32 %v980, %v1062
        %v1069 = vstv %s261
        %v1070 = vmul.f32 %v1069, %v658
        %v1071 = vmul.f32 %v1069, %v659
        %v1072 = vmul.f32 %v1069, %v660
        %v1076 = vrot.slane %v1070, 4
        %v1077 = vrot.slane %v1071, 4
        %v1078 = vsel %vm281, %v1076, %v1077
        %v1079 = vrot.slane %v1072, 4
        %v1080 = vsel %vm281, %v1077, %v1079
        %1081 = vrot.lane.b32.xlu0 %v1078, 127
        %v1082 = vpop.permute.xlu0 %1081
        %1083 = vrot.lane.b32.xlu0 %v1080, 127
        %v1084 = vpop.permute.xlu0 %1083
        %1085 = vrot.lane.b32.xlu0 %v1079, 127
        %v1086 = vpop.permute.xlu0 %1085
        %v1090 = vadd.f32 %v1002, %v1082
        %v1091 = vadd.f32 %v1003, %v1084
        %v1092 = vadd.f32 %v1004, %v1086
        %v1093 = vstv %s219
        %v1094 = vmul.f32 %v1093, %v550
        %v1095 = vmul.f32 %v1093, %v551
        %v1096 = vmul.f32 %v1093, %v552
        %v1100 = vrot.slane %v1094, 6
        %v1101 = vrot.slane %v1095, 6
        %v1102 = vsel %vm363, %v1100, %v1101
        %v1103 = vrot.slane %v1096, 6
        %v1104 = vsel %vm363, %v1101, %v1103
        %1105 = vrot.lane.b32.xlu0 %v1102, 127
        %v1106 = vpop.permute.xlu0 %1105
        %1107 = vrot.lane.b32.xlu0 %v1104, 127
        %v1108 = vpop.permute.xlu0 %1107
        %v1111 = vadd.f32 %v1023, %v1106
        %v1112 = vadd.f32 %v1024, %v1108
        %v1113 = vstv %s268
        %v1114 = vmul.f32 %v1113, %v658
        %v1115 = vmul.f32 %v1113, %v659
        %v1116 = vmul.f32 %v1113, %v660
        %v1120 = vrot.slane %v1114, 6
        %v1121 = vrot.slane %v1115, 6
        %v1122 = vsel %vm363, %v1120, %v1121
        %v1123 = vrot.slane %v1116, 6
        %v1124 = vsel %vm363, %v1121, %v1123
        %1125 = vrot.lane.b32.xlu0 %v1122, 127
        %v1126 = vpop.permute.xlu0 %1125
        %1127 = vrot.lane.b32.xlu0 %v1124, 127
        %v1128 = vpop.permute.xlu0 %1127
        %v1131 = vadd.f32 %v1043, %v1126
        %v1132 = vadd.f32 %v1044, %v1128
        %v1133 = vstv %s178
        %v1134 = vmul.f32 %v1133, %v550
        %v1135 = vmul.f32 %v1133, %v551
        %1138 = vrot.lane.b32.xlu0 %v1134, 126
        %v1139 = vpop.permute.xlu0 %1138
        %1140 = vrot.lane.b32.xlu0 %v1135, 126
        %v1141 = vpop.permute.xlu0 %1140
        %v1144 = vadd.f32 %v1111, %v1139
        %v1145 = vadd.f32 %v1112, %v1141
        %v1146 = vstv %s227
        %v1147 = vmul.f32 %v1146, %v658
        %v1148 = vmul.f32 %v1146, %v659
        %1151 = vrot.lane.b32.xlu0 %v1147, 126
        %v1152 = vpop.permute.xlu0 %1151
        %1153 = vrot.lane.b32.xlu0 %v1148, 126
        %v1154 = vpop.permute.xlu0 %1153
        %v1157 = vadd.f32 %v1131, %v1152
        %v1158 = vadd.f32 %v1132, %v1154
        %v1159 = vstv %s185
        %v1160 = vmul.f32 %v1159, %v550
        %v1161 = vmul.f32 %v1159, %v551
        %v1162 = vmul.f32 %v1159, %v552
        %1166 = vrot.lane.b32.xlu0 %v1160, 126
        %v1167 = vpop.permute.xlu0 %1166
        %1168 = vrot.lane.b32.xlu0 %v1161, 126
        %v1169 = vpop.permute.xlu0 %1168
        %1170 = vrot.lane.b32.xlu0 %v1162, 126
        %v1171 = vpop.permute.xlu0 %1170
        %v1175 = vadd.f32 %v1066, %v1167
        %v1176 = vadd.f32 %v1067, %v1169
        %v1177 = vadd.f32 %v1068, %v1171
        %v1178 = vstv %s234
        %v1179 = vmul.f32 %v1178, %v658
        %v1180 = vmul.f32 %v1178, %v659
        %v1181 = vmul.f32 %v1178, %v660
        %1185 = vrot.lane.b32.xlu0 %v1179, 126
        %v1186 = vpop.permute.xlu0 %1185
        %1187 = vrot.lane.b32.xlu0 %v1180, 126
        %v1188 = vpop.permute.xlu0 %1187
        %1189 = vrot.lane.b32.xlu0 %v1181, 126
        %v1190 = vpop.permute.xlu0 %1189
        %v1194 = vadd.f32 %v1090, %v1186
        %v1195 = vadd.f32 %v1091, %v1188
        %v1196 = vadd.f32 %v1092, %v1190
        %v1197 = vstv %s192
        %v1198 = vmul.f32 %v1197, %v550
        %v1199 = vmul.f32 %v1197, %v551
        %v1200 = vmul.f32 %v1197, %v552
        %v1204 = vrot.slane %v1198, 2
        %v1205 = vrot.slane %v1199, 2
        %v1206 = vsel %vm370, %v1204, %v1205
        %v1207 = vrot.slane %v1200, 2
        %v1208 = vsel %vm370, %v1205, %v1207
        %1209 = vrot.lane.b32.xlu0 %v1206, 126
        %v1210 = vpop.permute.xlu0 %1209
        %1211 = vrot.lane.b32.xlu0 %v1208, 126
        %v1212 = vpop.permute.xlu0 %1211
        %v1215 = vadd.f32 %v1144, %v1210
        %v1216 = vadd.f32 %v1145, %v1212
        %v1217 = vstv %s241
        %v1218 = vmul.f32 %v1217, %v658
        %v1219 = vmul.f32 %v1217, %v659
        %v1220 = vmul.f32 %v1217, %v660
        %v1224 = vrot.slane %v1218, 2
        %v1225 = vrot.slane %v1219, 2
        %v1226 = vsel %vm370, %v1224, %v1225
        %v1227 = vrot.slane %v1220, 2
        %v1228 = vsel %vm370, %v1225, %v1227
        %1229 = vrot.lane.b32.xlu0 %v1226, 126
        %v1230 = vpop.permute.xlu0 %1229
        %1231 = vrot.lane.b32.xlu0 %v1228, 126
        %v1232 = vpop.permute.xlu0 %1231
        %v1235 = vadd.f32 %v1157, %v1230
        %v1236 = vadd.f32 %v1158, %v1232
        %v1237 = vstv %s199
        %v1238 = vmul.f32 %v1237, %v550
        %v1239 = vmul.f32 %v1237, %v551
        %v1240 = vmul.f32 %v1237, %v552
        %v1244 = vrot.slane %v1238, 2
        %v1245 = vrot.slane %v1239, 2
        %v1246 = vsel %vm370, %v1244, %v1245
        %v1247 = vrot.slane %v1240, 2
        %v1248 = vsel %vm370, %v1245, %v1247
        %1249 = vrot.lane.b32.xlu0 %v1246, 126
        %v1250 = vpop.permute.xlu0 %1249
        %1251 = vrot.lane.b32.xlu0 %v1248, 126
        %v1252 = vpop.permute.xlu0 %1251
        %1253 = vrot.lane.b32.xlu0 %v1247, 126
        %v1254 = vpop.permute.xlu0 %1253
        %v1258 = vadd.f32 %v1175, %v1250
        %v1259 = vadd.f32 %v1176, %v1252
        %v1260 = vadd.f32 %v1177, %v1254
        %v1261 = vstv %s248
        %v1262 = vmul.f32 %v1261, %v658
        %v1263 = vmul.f32 %v1261, %v659
        %v1264 = vmul.f32 %v1261, %v660
        %v1268 = vrot.slane %v1262, 2
        %v1269 = vrot.slane %v1263, 2
        %v1270 = vsel %vm370, %v1268, %v1269
        %v1271 = vrot.slane %v1264, 2
        %v1272 = vsel %vm370, %v1269, %v1271
        %1273 = vrot.lane.b32.xlu0 %v1270, 126
        %v1274 = vpop.permute.xlu0 %1273
        %1275 = vrot.lane.b32.xlu0 %v1272, 126
        %v1276 = vpop.permute.xlu0 %1275
        %1277 = vrot.lane.b32.xlu0 %v1271, 126
        %v1278 = vpop.permute.xlu0 %1277
        %v1282 = vadd.f32 %v1194, %v1274
        %v1283 = vadd.f32 %v1195, %v1276
        %v1284 = vadd.f32 %v1196, %v1278
        %v1285 = vstv %s206
        %v1286 = vmul.f32 %v1285, %v550
        %v1287 = vmul.f32 %v1285, %v551
        %v1288 = vmul.f32 %v1285, %v552
        %v1292 = vrot.slane %v1286, 4
        %v1293 = vrot.slane %v1287, 4
        %v1294 = vsel %vm281, %v1292, %v1293
        %v1295 = vrot.slane %v1288, 4
        %v1296 = vsel %vm281, %v1293, %v1295
        %1297 = vrot.lane.b32.xlu0 %v1294, 126
        %v1298 = vpop.permute.xlu0 %1297
        %1299 = vrot.lane.b32.xlu0 %v1296, 126
        %v1300 = vpop.permute.xlu0 %1299
        %v1303 = vadd.f32 %v1215, %v1298
        %v1304 = vadd.f32 %v1216, %v1300
        %v1305 = vstv %s255
        %v1306 = vmul.f32 %v1305, %v658
        %v1307 = vmul.f32 %v1305, %v659
        %v1308 = vmul.f32 %v1305, %v660
        %v1312 = vrot.slane %v1306, 4
        %v1313 = vrot.slane %v1307, 4
        %v1314 = vsel %vm281, %v1312, %v1313
        %v1315 = vrot.slane %v1308, 4
        %v1316 = vsel %vm281, %v1313, %v1315
        %1317 = vrot.lane.b32.xlu0 %v1314, 126
        %v1318 = vpop.permute.xlu0 %1317
        %1319 = vrot.lane.b32.xlu0 %v1316, 126
        %v1320 = vpop.permute.xlu0 %1319
        %v1323 = vadd.f32 %v1235, %v1318
        %v1324 = vadd.f32 %v1236, %v1320
        %v1325 = vstv %s213
        %v1326 = vmul.f32 %v1325, %v550
        %v1327 = vmul.f32 %v1325, %v551
        %v1328 = vmul.f32 %v1325, %v552
        %v1332 = vrot.slane %v1326, 4
        %v1333 = vrot.slane %v1327, 4
        %v1334 = vsel %vm281, %v1332, %v1333
        %v1335 = vrot.slane %v1328, 4
        %v1336 = vsel %vm281, %v1333, %v1335
        %1337 = vrot.lane.b32.xlu0 %v1334, 126
        %v1338 = vpop.permute.xlu0 %1337
        %1339 = vrot.lane.b32.xlu0 %v1336, 126
        %v1340 = vpop.permute.xlu0 %1339
        %1341 = vrot.lane.b32.xlu0 %v1335, 126
        %v1342 = vpop.permute.xlu0 %1341
        %v1346 = vadd.f32 %v1258, %v1338
        %v1347 = vadd.f32 %v1259, %v1340
        %v1348 = vadd.f32 %v1260, %v1342
        %v1349 = vstv %s262
        %v1350 = vmul.f32 %v1349, %v658
        %v1351 = vmul.f32 %v1349, %v659
        %v1352 = vmul.f32 %v1349, %v660
        %v1356 = vrot.slane %v1350, 4
        %v1357 = vrot.slane %v1351, 4
        %v1358 = vsel %vm281, %v1356, %v1357
        %v1359 = vrot.slane %v1352, 4
        %v1360 = vsel %vm281, %v1357, %v1359
        %1361 = vrot.lane.b32.xlu0 %v1358, 126
        %v1362 = vpop.permute.xlu0 %1361
        %1363 = vrot.lane.b32.xlu0 %v1360, 126
        %v1364 = vpop.permute.xlu0 %1363
        %1365 = vrot.lane.b32.xlu0 %v1359, 126
        %v1366 = vpop.permute.xlu0 %1365
        %v1370 = vadd.f32 %v1282, %v1362
        %v1371 = vadd.f32 %v1283, %v1364
        %v1372 = vadd.f32 %v1284, %v1366
        %v1373 = vstv %s220
        %v1374 = vmul.f32 %v1373, %v550
        %v1375 = vmul.f32 %v1373, %v551
        %v1376 = vmul.f32 %v1373, %v552
        %v1380 = vrot.slane %v1374, 6
        %v1381 = vrot.slane %v1375, 6
        %v1382 = vsel %vm363, %v1380, %v1381
        %v1383 = vrot.slane %v1376, 6
        %v1384 = vsel %vm363, %v1381, %v1383
        %1385 = vrot.lane.b32.xlu0 %v1382, 126
        %v1386 = vpop.permute.xlu0 %1385
        %1387 = vrot.lane.b32.xlu0 %v1384, 126
        %v1388 = vpop.permute.xlu0 %1387
        %v1391 = vadd.f32 %v1303, %v1386
        %v1392 = vadd.f32 %v1304, %v1388
        %v1393 = vstv %s269
        %v1394 = vmul.f32 %v1393, %v658
        %v1395 = vmul.f32 %v1393, %v659
        %v1396 = vmul.f32 %v1393, %v660
        %v1400 = vrot.slane %v1394, 6
        %v1401 = vrot.slane %v1395, 6
        %v1402 = vsel %vm363, %v1400, %v1401
        %v1403 = vrot.slane %v1396, 6
        %v1404 = vsel %vm363, %v1401, %v1403
        %1405 = vrot.lane.b32.xlu0 %v1402, 126
        %v1406 = vpop.permute.xlu0 %1405
        %1407 = vrot.lane.b32.xlu0 %v1404, 126
        %v1408 = vpop.permute.xlu0 %1407
        %v1411 = vadd.f32 %v1323, %v1406
        %v1412 = vadd.f32 %v1324, %v1408
        %v1413 = vstv %s179
        %v1414 = vmul.f32 %v1413, %v550
        %v1415 = vmul.f32 %v1413, %v551
        %1418 = vrot.lane.b32.xlu0 %v1414, 125
        %v1419 = vpop.permute.xlu0 %1418
        %1420 = vrot.lane.b32.xlu0 %v1415, 125
        %v1421 = vpop.permute.xlu0 %1420
        %v1424 = vadd.f32 %v1391, %v1419
        %v1425 = vadd.f32 %v1392, %v1421
        %v1426 = vstv %s228
        %v1427 = vmul.f32 %v1426, %v658
        %v1428 = vmul.f32 %v1426, %v659
        %1431 = vrot.lane.b32.xlu0 %v1427, 125
        %v1432 = vpop.permute.xlu0 %1431
        %1433 = vrot.lane.b32.xlu0 %v1428, 125
        %v1434 = vpop.permute.xlu0 %1433
        %v1437 = vadd.f32 %v1411, %v1432
        %v1438 = vadd.f32 %v1412, %v1434
        %v1439 = vstv %s186
        %v1440 = vmul.f32 %v1439, %v550
        %v1441 = vmul.f32 %v1439, %v551
        %v1442 = vmul.f32 %v1439, %v552
        %1446 = vrot.lane.b32.xlu0 %v1440, 125
        %v1447 = vpop.permute.xlu0 %1446
        %1448 = vrot.lane.b32.xlu0 %v1441, 125
        %v1449 = vpop.permute.xlu0 %1448
        %1450 = vrot.lane.b32.xlu0 %v1442, 125
        %v1451 = vpop.permute.xlu0 %1450
        %v1455 = vadd.f32 %v1346, %v1447
        %v1456 = vadd.f32 %v1347, %v1449
        %v1457 = vadd.f32 %v1348, %v1451
        %v1458 = vstv %s235
        %v1459 = vmul.f32 %v1458, %v658
        %v1460 = vmul.f32 %v1458, %v659
        %v1461 = vmul.f32 %v1458, %v660
        %1465 = vrot.lane.b32.xlu0 %v1459, 125
        %v1466 = vpop.permute.xlu0 %1465
        %1467 = vrot.lane.b32.xlu0 %v1460, 125
        %v1468 = vpop.permute.xlu0 %1467
        %1469 = vrot.lane.b32.xlu0 %v1461, 125
        %v1470 = vpop.permute.xlu0 %1469
        %v1474 = vadd.f32 %v1370, %v1466
        %v1475 = vadd.f32 %v1371, %v1468
        %v1476 = vadd.f32 %v1372, %v1470
        %v1477 = vstv %s193
        %v1478 = vmul.f32 %v1477, %v550
        %v1479 = vmul.f32 %v1477, %v551
        %v1480 = vmul.f32 %v1477, %v552
        %v1484 = vrot.slane %v1478, 2
        %v1485 = vrot.slane %v1479, 2
        %v1486 = vsel %vm370, %v1484, %v1485
        %v1487 = vrot.slane %v1480, 2
        %v1488 = vsel %vm370, %v1485, %v1487
        %1489 = vrot.lane.b32.xlu0 %v1486, 125
        %v1490 = vpop.permute.xlu0 %1489
        %1491 = vrot.lane.b32.xlu0 %v1488, 125
        %v1492 = vpop.permute.xlu0 %1491
        %v1495 = vadd.f32 %v1424, %v1490
        %v1496 = vadd.f32 %v1425, %v1492
        %v1497 = vstv %s242
        %v1498 = vmul.f32 %v1497, %v658
        %v1499 = vmul.f32 %v1497, %v659
        %v1500 = vmul.f32 %v1497, %v660
        %v1504 = vrot.slane %v1498, 2
        %v1505 = vrot.slane %v1499, 2
        %v1506 = vsel %vm370, %v1504, %v1505
        %v1507 = vrot.slane %v1500, 2
        %v1508 = vsel %vm370, %v1505, %v1507
        %1509 = vrot.lane.b32.xlu0 %v1506, 125
        %v1510 = vpop.permute.xlu0 %1509
        %1511 = vrot.lane.b32.xlu0 %v1508, 125
        %v1512 = vpop.permute.xlu0 %1511
        %v1515 = vadd.f32 %v1437, %v1510
        %v1516 = vadd.f32 %v1438, %v1512
        %v1517 = vstv %s200
        %v1518 = vmul.f32 %v1517, %v550
        %v1519 = vmul.f32 %v1517, %v551
        %v1520 = vmul.f32 %v1517, %v552
        %v1524 = vrot.slane %v1518, 2
        %v1525 = vrot.slane %v1519, 2
        %v1526 = vsel %vm370, %v1524, %v1525
        %v1527 = vrot.slane %v1520, 2
        %v1528 = vsel %vm370, %v1525, %v1527
        %1529 = vrot.lane.b32.xlu0 %v1526, 125
        %v1530 = vpop.permute.xlu0 %1529
        %1531 = vrot.lane.b32.xlu0 %v1528, 125
        %v1532 = vpop.permute.xlu0 %1531
        %1533 = vrot.lane.b32.xlu0 %v1527, 125
        %v1534 = vpop.permute.xlu0 %1533
        %v1538 = vadd.f32 %v1455, %v1530
        %v1539 = vadd.f32 %v1456, %v1532
        %v1540 = vadd.f32 %v1457, %v1534
        %v1541 = vstv %s249
        %v1542 = vmul.f32 %v1541, %v658
        %v1543 = vmul.f32 %v1541, %v659
        %v1544 = vmul.f32 %v1541, %v660
        %v1548 = vrot.slane %v1542, 2
        %v1549 = vrot.slane %v1543, 2
        %v1550 = vsel %vm370, %v1548, %v1549
        %v1551 = vrot.slane %v1544, 2
        %v1552 = vsel %vm370, %v1549, %v1551
        %1553 = vrot.lane.b32.xlu0 %v1550, 125
        %v1554 = vpop.permute.xlu0 %1553
        %1555 = vrot.lane.b32.xlu0 %v1552, 125
        %v1556 = vpop.permute.xlu0 %1555
        %1557 = vrot.lane.b32.xlu0 %v1551, 125
        %v1558 = vpop.permute.xlu0 %1557
        %v1562 = vadd.f32 %v1474, %v1554
        %v1563 = vadd.f32 %v1475, %v1556
        %v1564 = vadd.f32 %v1476, %v1558
        %v1565 = vstv %s207
        %v1566 = vmul.f32 %v1565, %v550
        %v1567 = vmul.f32 %v1565, %v551
        %v1568 = vmul.f32 %v1565, %v552
        %v1572 = vrot.slane %v1566, 4
        %v1573 = vrot.slane %v1567, 4
        %v1574 = vsel %vm281, %v1572, %v1573
        %v1575 = vrot.slane %v1568, 4
        %v1576 = vsel %vm281, %v1573, %v1575
        %1577 = vrot.lane.b32.xlu0 %v1574, 125
        %v1578 = vpop.permute.xlu0 %1577
        %1579 = vrot.lane.b32.xlu0 %v1576, 125
        %v1580 = vpop.permute.xlu0 %1579
        %v1583 = vadd.f32 %v1495, %v1578
        %v1584 = vadd.f32 %v1496, %v1580
        %v1585 = vstv %s256
        %v1586 = vmul.f32 %v1585, %v658
        %v1587 = vmul.f32 %v1585, %v659
        %v1588 = vmul.f32 %v1585, %v660
        %v1592 = vrot.slane %v1586, 4
        %v1593 = vrot.slane %v1587, 4
        %v1594 = vsel %vm281, %v1592, %v1593
        %v1595 = vrot.slane %v1588, 4
        %v1596 = vsel %vm281, %v1593, %v1595
        %1597 = vrot.lane.b32.xlu0 %v1594, 125
        %v1598 = vpop.permute.xlu0 %1597
        %1599 = vrot.lane.b32.xlu0 %v1596, 125
        %v1600 = vpop.permute.xlu0 %1599
        %v1603 = vadd.f32 %v1515, %v1598
        %v1604 = vadd.f32 %v1516, %v1600
        %v1605 = vstv %s214
        %v1606 = vmul.f32 %v1605, %v550
        %v1607 = vmul.f32 %v1605, %v551
        %v1608 = vmul.f32 %v1605, %v552
        %v1612 = vrot.slane %v1606, 4
        %v1613 = vrot.slane %v1607, 4
        %v1614 = vsel %vm281, %v1612, %v1613
        %v1615 = vrot.slane %v1608, 4
        %v1616 = vsel %vm281, %v1613, %v1615
        %1617 = vrot.lane.b32.xlu0 %v1614, 125
        %v1618 = vpop.permute.xlu0 %1617
        %1619 = vrot.lane.b32.xlu0 %v1616, 125
        %v1620 = vpop.permute.xlu0 %1619
        %1621 = vrot.lane.b32.xlu0 %v1615, 125
        %v1622 = vpop.permute.xlu0 %1621
        %v1626 = vadd.f32 %v1538, %v1618
        %v1627 = vadd.f32 %v1539, %v1620
        %v1628 = vadd.f32 %v1540, %v1622
        %v1629 = vstv %s263
        %v1630 = vmul.f32 %v1629, %v658
        %v1631 = vmul.f32 %v1629, %v659
        %v1632 = vmul.f32 %v1629, %v660
        %v1636 = vrot.slane %v1630, 4
        %v1637 = vrot.slane %v1631, 4
        %v1638 = vsel %vm281, %v1636, %v1637
        %v1639 = vrot.slane %v1632, 4
        %v1640 = vsel %vm281, %v1637, %v1639
        %1641 = vrot.lane.b32.xlu0 %v1638, 125
        %v1642 = vpop.permute.xlu0 %1641
        %1643 = vrot.lane.b32.xlu0 %v1640, 125
        %v1644 = vpop.permute.xlu0 %1643
        %1645 = vrot.lane.b32.xlu0 %v1639, 125
        %v1646 = vpop.permute.xlu0 %1645
        %v1650 = vadd.f32 %v1562, %v1642
        %v1651 = vadd.f32 %v1563, %v1644
        %v1652 = vadd.f32 %v1564, %v1646
        %v1653 = vstv %s221
        %v1654 = vmul.f32 %v1653, %v550
        %v1655 = vmul.f32 %v1653, %v551
        %v1656 = vmul.f32 %v1653, %v552
        %v1660 = vrot.slane %v1654, 6
        %v1661 = vrot.slane %v1655, 6
        %v1662 = vsel %vm363, %v1660, %v1661
        %v1663 = vrot.slane %v1656, 6
        %v1664 = vsel %vm363, %v1661, %v1663
        %1665 = vrot.lane.b32.xlu0 %v1662, 125
        %v1666 = vpop.permute.xlu0 %1665
        %1667 = vrot.lane.b32.xlu0 %v1664, 125
        %v1668 = vpop.permute.xlu0 %1667
        %v1671 = vadd.f32 %v1583, %v1666
        %v1672 = vadd.f32 %v1584, %v1668
        %v1673 = vstv %s270
        %v1674 = vmul.f32 %v1673, %v658
        %v1675 = vmul.f32 %v1673, %v659
        %v1676 = vmul.f32 %v1673, %v660
        %v1680 = vrot.slane %v1674, 6
        %v1681 = vrot.slane %v1675, 6
        %v1682 = vsel %vm363, %v1680, %v1681
        %v1683 = vrot.slane %v1676, 6
        %v1684 = vsel %vm363, %v1681, %v1683
        %1685 = vrot.lane.b32.xlu0 %v1682, 125
        %v1686 = vpop.permute.xlu0 %1685
        %1687 = vrot.lane.b32.xlu0 %v1684, 125
        %v1688 = vpop.permute.xlu0 %1687
        %v1691 = vadd.f32 %v1603, %v1686
        %v1692 = vadd.f32 %v1604, %v1688
        %v1693 = vstv %s180
        %v1694 = vmul.f32 %v1693, %v550
        %v1695 = vmul.f32 %v1693, %v551
        %1698 = vrot.lane.b32.xlu0 %v1694, 124
        %v1699 = vpop.permute.xlu0 %1698
        %1700 = vrot.lane.b32.xlu0 %v1695, 124
        %v1701 = vpop.permute.xlu0 %1700
        %v1704 = vadd.f32 %v1671, %v1699
        %v1705 = vadd.f32 %v1672, %v1701
        %v1706 = vstv %s229
        %v1707 = vmul.f32 %v1706, %v658
        %v1708 = vmul.f32 %v1706, %v659
        %1711 = vrot.lane.b32.xlu0 %v1707, 124
        %v1712 = vpop.permute.xlu0 %1711
        %1713 = vrot.lane.b32.xlu0 %v1708, 124
        %v1714 = vpop.permute.xlu0 %1713
        %v1717 = vadd.f32 %v1691, %v1712
        %v1718 = vadd.f32 %v1692, %v1714
        %v1719 = vstv %s187
        %v1720 = vmul.f32 %v1719, %v550
        %v1721 = vmul.f32 %v1719, %v551
        %v1722 = vmul.f32 %v1719, %v552
        %1726 = vrot.lane.b32.xlu0 %v1720, 124
        %v1727 = vpop.permute.xlu0 %1726
        %1728 = vrot.lane.b32.xlu0 %v1721, 124
        %v1729 = vpop.permute.xlu0 %1728
        %1730 = vrot.lane.b32.xlu0 %v1722, 124
        %v1731 = vpop.permute.xlu0 %1730
        %v1735 = vadd.f32 %v1626, %v1727
        %v1736 = vadd.f32 %v1627, %v1729
        %v1737 = vadd.f32 %v1628, %v1731
        %v1738 = vstv %s236
        %v1739 = vmul.f32 %v1738, %v658
        %v1740 = vmul.f32 %v1738, %v659
        %v1741 = vmul.f32 %v1738, %v660
        %1745 = vrot.lane.b32.xlu0 %v1739, 124
        %v1746 = vpop.permute.xlu0 %1745
        %1747 = vrot.lane.b32.xlu0 %v1740, 124
        %v1748 = vpop.permute.xlu0 %1747
        %1749 = vrot.lane.b32.xlu0 %v1741, 124
        %v1750 = vpop.permute.xlu0 %1749
        %v1754 = vadd.f32 %v1650, %v1746
        %v1755 = vadd.f32 %v1651, %v1748
        %v1756 = vadd.f32 %v1652, %v1750
        %v1757 = vstv %s194
        %v1758 = vmul.f32 %v1757, %v550
        %v1759 = vmul.f32 %v1757, %v551
        %v1760 = vmul.f32 %v1757, %v552
        %v1764 = vrot.slane %v1758, 2
        %v1765 = vrot.slane %v1759, 2
        %v1766 = vsel %vm370, %v1764, %v1765
        %v1767 = vrot.slane %v1760, 2
        %v1768 = vsel %vm370, %v1765, %v1767
        %1769 = vrot.lane.b32.xlu0 %v1766, 124
        %v1770 = vpop.permute.xlu0 %1769
        %1771 = vrot.lane.b32.xlu0 %v1768, 124
        %v1772 = vpop.permute.xlu0 %1771
        %v1775 = vadd.f32 %v1704, %v1770
        %v1776 = vadd.f32 %v1705, %v1772
        %v1777 = vstv %s243
        %v1778 = vmul.f32 %v1777, %v658
        %v1779 = vmul.f32 %v1777, %v659
        %v1780 = vmul.f32 %v1777, %v660
        %v1784 = vrot.slane %v1778, 2
        %v1785 = vrot.slane %v1779, 2
        %v1786 = vsel %vm370, %v1784, %v1785
        %v1787 = vrot.slane %v1780, 2
        %v1788 = vsel %vm370, %v1785, %v1787
        %1789 = vrot.lane.b32.xlu0 %v1786, 124
        %v1790 = vpop.permute.xlu0 %1789
        %1791 = vrot.lane.b32.xlu0 %v1788, 124
        %v1792 = vpop.permute.xlu0 %1791
        %v1795 = vadd.f32 %v1717, %v1790
        %v1796 = vadd.f32 %v1718, %v1792
        %v1797 = vstv %s201
        %v1798 = vmul.f32 %v1797, %v550
        %v1799 = vmul.f32 %v1797, %v551
        %v1800 = vmul.f32 %v1797, %v552
        %v1804 = vrot.slane %v1798, 2
        %v1805 = vrot.slane %v1799, 2
        %v1806 = vsel %vm370, %v1804, %v1805
        %v1807 = vrot.slane %v1800, 2
        %v1808 = vsel %vm370, %v1805, %v1807
        %1809 = vrot.lane.b32.xlu0 %v1806, 124
        %v1810 = vpop.permute.xlu0 %1809
        %1811 = vrot.lane.b32.xlu0 %v1808, 124
        %v1812 = vpop.permute.xlu0 %1811
        %1813 = vrot.lane.b32.xlu0 %v1807, 124
        %v1814 = vpop.permute.xlu0 %1813
        %v1818 = vadd.f32 %v1735, %v1810
        %v1819 = vadd.f32 %v1736, %v1812
        %v1820 = vadd.f32 %v1737, %v1814
        %v1821 = vstv %s250
        %v1822 = vmul.f32 %v1821, %v658
        %v1823 = vmul.f32 %v1821, %v659
        %v1824 = vmul.f32 %v1821, %v660
        %v1828 = vrot.slane %v1822, 2
        %v1829 = vrot.slane %v1823, 2
        %v1830 = vsel %vm370, %v1828, %v1829
        %v1831 = vrot.slane %v1824, 2
        %v1832 = vsel %vm370, %v1829, %v1831
        %1833 = vrot.lane.b32.xlu0 %v1830, 124
        %v1834 = vpop.permute.xlu0 %1833
        %1835 = vrot.lane.b32.xlu0 %v1832, 124
        %v1836 = vpop.permute.xlu0 %1835
        %1837 = vrot.lane.b32.xlu0 %v1831, 124
        %v1838 = vpop.permute.xlu0 %1837
        %v1842 = vadd.f32 %v1754, %v1834
        %v1843 = vadd.f32 %v1755, %v1836
        %v1844 = vadd.f32 %v1756, %v1838
        %v1845 = vstv %s208
        %v1846 = vmul.f32 %v1845, %v550
        %v1847 = vmul.f32 %v1845, %v551
        %v1848 = vmul.f32 %v1845, %v552
        %v1852 = vrot.slane %v1846, 4
        %v1853 = vrot.slane %v1847, 4
        %v1854 = vsel %vm281, %v1852, %v1853
        %v1855 = vrot.slane %v1848, 4
        %v1856 = vsel %vm281, %v1853, %v1855
        %1857 = vrot.lane.b32.xlu0 %v1854, 124
        %v1858 = vpop.permute.xlu0 %1857
        %1859 = vrot.lane.b32.xlu0 %v1856, 124
        %v1860 = vpop.permute.xlu0 %1859
        %v1863 = vadd.f32 %v1775, %v1858
        %v1864 = vadd.f32 %v1776, %v1860
        %v1865 = vstv %s257
        %v1866 = vmul.f32 %v1865, %v658
        %v1867 = vmul.f32 %v1865, %v659
        %v1868 = vmul.f32 %v1865, %v660
        %v1872 = vrot.slane %v1866, 4
        %v1873 = vrot.slane %v1867, 4
        %v1874 = vsel %vm281, %v1872, %v1873
        %v1875 = vrot.slane %v1868, 4
        %v1876 = vsel %vm281, %v1873, %v1875
        %1877 = vrot.lane.b32.xlu0 %v1874, 124
        %v1878 = vpop.permute.xlu0 %1877
        %1879 = vrot.lane.b32.xlu0 %v1876, 124
        %v1880 = vpop.permute.xlu0 %1879
        %v1883 = vadd.f32 %v1795, %v1878
        %v1884 = vadd.f32 %v1796, %v1880
        %v1885 = vstv %s215
        %v1886 = vmul.f32 %v1885, %v550
        %v1887 = vmul.f32 %v1885, %v551
        %v1888 = vmul.f32 %v1885, %v552
        %v1892 = vrot.slane %v1886, 4
        %v1893 = vrot.slane %v1887, 4
        %v1894 = vsel %vm281, %v1892, %v1893
        %v1895 = vrot.slane %v1888, 4
        %v1896 = vsel %vm281, %v1893, %v1895
        %1897 = vrot.lane.b32.xlu0 %v1894, 124
        %v1898 = vpop.permute.xlu0 %1897
        %1899 = vrot.lane.b32.xlu0 %v1896, 124
        %v1900 = vpop.permute.xlu0 %1899
        %1901 = vrot.lane.b32.xlu0 %v1895, 124
        %v1902 = vpop.permute.xlu0 %1901
        %v1906 = vadd.f32 %v1818, %v1898
        %v1907 = vadd.f32 %v1819, %v1900
        %v1908 = vadd.f32 %v1820, %v1902
        %v1909 = vstv %s264
        %v1910 = vmul.f32 %v1909, %v658
        %v1911 = vmul.f32 %v1909, %v659
        %v1912 = vmul.f32 %v1909, %v660
        %v1916 = vrot.slane %v1910, 4
        %v1917 = vrot.slane %v1911, 4
        %v1918 = vsel %vm281, %v1916, %v1917
        %v1919 = vrot.slane %v1912, 4
        %v1920 = vsel %vm281, %v1917, %v1919
        %1921 = vrot.lane.b32.xlu0 %v1918, 124
        %v1922 = vpop.permute.xlu0 %1921
        %1923 = vrot.lane.b32.xlu0 %v1920, 124
        %v1924 = vpop.permute.xlu0 %1923
        %1925 = vrot.lane.b32.xlu0 %v1919, 124
        %v1926 = vpop.permute.xlu0 %1925
        %v1930 = vadd.f32 %v1842, %v1922
        %v1931 = vadd.f32 %v1843, %v1924
        %v1932 = vadd.f32 %v1844, %v1926
        %v1933 = vstv %s222
        %v1934 = vmul.f32 %v1933, %v550
        %v1935 = vmul.f32 %v1933, %v551
        %v1936 = vmul.f32 %v1933, %v552
        %v1940 = vrot.slane %v1934, 6
        %v1941 = vrot.slane %v1935, 6
        %v1942 = vsel %vm363, %v1940, %v1941
        %v1943 = vrot.slane %v1936, 6
        %v1944 = vsel %vm363, %v1941, %v1943
        %1945 = vrot.lane.b32.xlu0 %v1942, 124
        %v1946 = vpop.permute.xlu0 %1945
        %1947 = vrot.lane.b32.xlu0 %v1944, 124
        %v1948 = vpop.permute.xlu0 %1947
        %v1951 = vadd.f32 %v1863, %v1946
        %v1952 = vadd.f32 %v1864, %v1948
        %v1953 = vstv %s271
        %v1954 = vmul.f32 %v1953, %v658
        %v1955 = vmul.f32 %v1953, %v659
        %v1956 = vmul.f32 %v1953, %v660
        %v1960 = vrot.slane %v1954, 6
        %v1961 = vrot.slane %v1955, 6
        %v1962 = vsel %vm363, %v1960, %v1961
        %v1963 = vrot.slane %v1956, 6
        %v1964 = vsel %vm363, %v1961, %v1963
        %1965 = vrot.lane.b32.xlu0 %v1962, 124
        %v1966 = vpop.permute.xlu0 %1965
        %1967 = vrot.lane.b32.xlu0 %v1964, 124
        %v1968 = vpop.permute.xlu0 %1967
        %v1971 = vadd.f32 %v1883, %v1966
        %v1972 = vadd.f32 %v1884, %v1968
        %v1973 = vstv %s181
        %v1974 = vmul.f32 %v1973, %v550
        %v1975 = vmul.f32 %v1973, %v551
        %1978 = vrot.lane.b32.xlu0 %v1974, 123
        %v1979 = vpop.permute.xlu0 %1978
        %1980 = vrot.lane.b32.xlu0 %v1975, 123
        %v1981 = vpop.permute.xlu0 %1980
        %v1984 = vadd.f32 %v1951, %v1979
        %v1985 = vadd.f32 %v1952, %v1981
        %v1986 = vstv %s230
        %v1987 = vmul.f32 %v1986, %v658
        %v1988 = vmul.f32 %v1986, %v659
        %1991 = vrot.lane.b32.xlu0 %v1987, 123
        %v1992 = vpop.permute.xlu0 %1991
        %1993 = vrot.lane.b32.xlu0 %v1988, 123
        %v1994 = vpop.permute.xlu0 %1993
        %v1997 = vadd.f32 %v1971, %v1992
        %v1998 = vadd.f32 %v1972, %v1994
        %v1999 = vstv %s188
        %v2000 = vmul.f32 %v1999, %v550
        %v2001 = vmul.f32 %v1999, %v551
        %v2002 = vmul.f32 %v1999, %v552
        %2006 = vrot.lane.b32.xlu0 %v2000, 123
        %v2007 = vpop.permute.xlu0 %2006
        %2008 = vrot.lane.b32.xlu0 %v2001, 123
        %v2009 = vpop.permute.xlu0 %2008
        %2010 = vrot.lane.b32.xlu0 %v2002, 123
        %v2011 = vpop.permute.xlu0 %2010
        %v2015 = vadd.f32 %v1906, %v2007
        %v2016 = vadd.f32 %v1907, %v2009
        %v2017 = vadd.f32 %v1908, %v2011
        %v2018 = vstv %s237
        %v2019 = vmul.f32 %v2018, %v658
        %v2020 = vmul.f32 %v2018, %v659
        %v2021 = vmul.f32 %v2018, %v660
        %2025 = vrot.lane.b32.xlu0 %v2019, 123
        %v2026 = vpop.permute.xlu0 %2025
        %2027 = vrot.lane.b32.xlu0 %v2020, 123
        %v2028 = vpop.permute.xlu0 %2027
        %2029 = vrot.lane.b32.xlu0 %v2021, 123
        %v2030 = vpop.permute.xlu0 %2029
        %v2034 = vadd.f32 %v1930, %v2026
        %v2035 = vadd.f32 %v1931, %v2028
        %v2036 = vadd.f32 %v1932, %v2030
        %v2037 = vstv %s195
        %v2038 = vmul.f32 %v2037, %v550
        %v2039 = vmul.f32 %v2037, %v551
        %v2040 = vmul.f32 %v2037, %v552
        %v2044 = vrot.slane %v2038, 2
        %v2045 = vrot.slane %v2039, 2
        %v2046 = vsel %vm370, %v2044, %v2045
        %v2047 = vrot.slane %v2040, 2
        %v2048 = vsel %vm370, %v2045, %v2047
        %2049 = vrot.lane.b32.xlu0 %v2046, 123
        %v2050 = vpop.permute.xlu0 %2049
        %2051 = vrot.lane.b32.xlu0 %v2048, 123
        %v2052 = vpop.permute.xlu0 %2051
        %v2055 = vadd.f32 %v1984, %v2050
        %v2056 = vadd.f32 %v1985, %v2052
        %v2057 = vstv %s244
        %v2058 = vmul.f32 %v2057, %v658
        %v2059 = vmul.f32 %v2057, %v659
        %v2060 = vmul.f32 %v2057, %v660
        %v2064 = vrot.slane %v2058, 2
        %v2065 = vrot.slane %v2059, 2
        %v2066 = vsel %vm370, %v2064, %v2065
        %v2067 = vrot.slane %v2060, 2
        %v2068 = vsel %vm370, %v2065, %v2067
        %2069 = vrot.lane.b32.xlu0 %v2066, 123
        %v2070 = vpop.permute.xlu0 %2069
        %2071 = vrot.lane.b32.xlu0 %v2068, 123
        %v2072 = vpop.permute.xlu0 %2071
        %v2075 = vadd.f32 %v1997, %v2070
        %v2076 = vadd.f32 %v1998, %v2072
        %v2077 = vstv %s202
        %v2078 = vmul.f32 %v2077, %v550
        %v2079 = vmul.f32 %v2077, %v551
        %v2080 = vmul.f32 %v2077, %v552
        %v2084 = vrot.slane %v2078, 2
        %v2085 = vrot.slane %v2079, 2
        %v2086 = vsel %vm370, %v2084, %v2085
        %v2087 = vrot.slane %v2080, 2
        %v2088 = vsel %vm370, %v2085, %v2087
        %2089 = vrot.lane.b32.xlu0 %v2086, 123
        %v2090 = vpop.permute.xlu0 %2089
        %2091 = vrot.lane.b32.xlu0 %v2088, 123
        %v2092 = vpop.permute.xlu0 %2091
        %2093 = vrot.lane.b32.xlu0 %v2087, 123
        %v2094 = vpop.permute.xlu0 %2093
        %v2098 = vadd.f32 %v2015, %v2090
        %v2099 = vadd.f32 %v2016, %v2092
        %v2100 = vadd.f32 %v2017, %v2094
        %v2101 = vstv %s251
        %v2102 = vmul.f32 %v2101, %v658
        %v2103 = vmul.f32 %v2101, %v659
        %v2104 = vmul.f32 %v2101, %v660
        %v2108 = vrot.slane %v2102, 2
        %v2109 = vrot.slane %v2103, 2
        %v2110 = vsel %vm370, %v2108, %v2109
        %v2111 = vrot.slane %v2104, 2
        %v2112 = vsel %vm370, %v2109, %v2111
        %2113 = vrot.lane.b32.xlu0 %v2110, 123
        %v2114 = vpop.permute.xlu0 %2113
        %2115 = vrot.lane.b32.xlu0 %v2112, 123
        %v2116 = vpop.permute.xlu0 %2115
        %2117 = vrot.lane.b32.xlu0 %v2111, 123
        %v2118 = vpop.permute.xlu0 %2117
        %v2122 = vadd.f32 %v2034, %v2114
        %v2123 = vadd.f32 %v2035, %v2116
        %v2124 = vadd.f32 %v2036, %v2118
        %v2125 = vstv %s209
        %v2126 = vmul.f32 %v2125, %v550
        %v2127 = vmul.f32 %v2125, %v551
        %v2128 = vmul.f32 %v2125, %v552
        %v2132 = vrot.slane %v2126, 4
        %v2133 = vrot.slane %v2127, 4
        %v2134 = vsel %vm281, %v2132, %v2133
        %v2135 = vrot.slane %v2128, 4
        %v2136 = vsel %vm281, %v2133, %v2135
        %2137 = vrot.lane.b32.xlu0 %v2134, 123
        %v2138 = vpop.permute.xlu0 %2137
        %2139 = vrot.lane.b32.xlu0 %v2136, 123
        %v2140 = vpop.permute.xlu0 %2139
        %v2143 = vadd.f32 %v2055, %v2138
        %v2144 = vadd.f32 %v2056, %v2140
        %v2145 = vstv %s258
        %v2146 = vmul.f32 %v2145, %v658
        %v2147 = vmul.f32 %v2145, %v659
        %v2148 = vmul.f32 %v2145, %v660
        %v2152 = vrot.slane %v2146, 4
        %v2153 = vrot.slane %v2147, 4
        %v2154 = vsel %vm281, %v2152, %v2153
        %v2155 = vrot.slane %v2148, 4
        %v2156 = vsel %vm281, %v2153, %v2155
        %2157 = vrot.lane.b32.xlu0 %v2154, 123
        %v2158 = vpop.permute.xlu0 %2157
        %2159 = vrot.lane.b32.xlu0 %v2156, 123
        %v2160 = vpop.permute.xlu0 %2159
        %v2163 = vadd.f32 %v2075, %v2158
        %v2164 = vadd.f32 %v2076, %v2160
        %v2165 = vstv %s216
        %v2166 = vmul.f32 %v2165, %v550
        %v2167 = vmul.f32 %v2165, %v551
        %v2168 = vmul.f32 %v2165, %v552
        %v2172 = vrot.slane %v2166, 4
        %v2173 = vrot.slane %v2167, 4
        %v2174 = vsel %vm281, %v2172, %v2173
        %v2175 = vrot.slane %v2168, 4
        %v2176 = vsel %vm281, %v2173, %v2175
        %2177 = vrot.lane.b32.xlu0 %v2174, 123
        %v2178 = vpop.permute.xlu0 %2177
        %2179 = vrot.lane.b32.xlu0 %v2176, 123
        %v2180 = vpop.permute.xlu0 %2179
        %2181 = vrot.lane.b32.xlu0 %v2175, 123
        %v2182 = vpop.permute.xlu0 %2181
        %v2186 = vadd.f32 %v2098, %v2178
        %v2187 = vadd.f32 %v2099, %v2180
        %v2188 = vadd.f32 %v2100, %v2182
        %v2189 = vstv %s265
        %v2190 = vmul.f32 %v2189, %v658
        %v2191 = vmul.f32 %v2189, %v659
        %v2192 = vmul.f32 %v2189, %v660
        %v2196 = vrot.slane %v2190, 4
        %v2197 = vrot.slane %v2191, 4
        %v2198 = vsel %vm281, %v2196, %v2197
        %v2199 = vrot.slane %v2192, 4
        %v2200 = vsel %vm281, %v2197, %v2199
        %2201 = vrot.lane.b32.xlu0 %v2198, 123
        %v2202 = vpop.permute.xlu0 %2201
        %2203 = vrot.lane.b32.xlu0 %v2200, 123
        %v2204 = vpop.permute.xlu0 %2203
        %2205 = vrot.lane.b32.xlu0 %v2199, 123
        %v2206 = vpop.permute.xlu0 %2205
        %v2210 = vadd.f32 %v2122, %v2202
        %v2211 = vadd.f32 %v2123, %v2204
        %v2212 = vadd.f32 %v2124, %v2206
        %v2213 = vstv %s223
        %v2214 = vmul.f32 %v2213, %v550
        %v2215 = vmul.f32 %v2213, %v551
        %v2216 = vmul.f32 %v2213, %v552
        %v2220 = vrot.slane %v2214, 6
        %v2221 = vrot.slane %v2215, 6
        %v2222 = vsel %vm363, %v2220, %v2221
        %v2223 = vrot.slane %v2216, 6
        %v2224 = vsel %vm363, %v2221, %v2223
        %2225 = vrot.lane.b32.xlu0 %v2222, 123
        %v2226 = vpop.permute.xlu0 %2225
        %2227 = vrot.lane.b32.xlu0 %v2224, 123
        %v2228 = vpop.permute.xlu0 %2227
        %v2231 = vadd.f32 %v2143, %v2226
        %v2232 = vadd.f32 %v2144, %v2228
        %v2233 = vstv %s272
        %v2234 = vmul.f32 %v2233, %v658
        %v2235 = vmul.f32 %v2233, %v659
        %v2236 = vmul.f32 %v2233, %v660
        %v2240 = vrot.slane %v2234, 6
        %v2241 = vrot.slane %v2235, 6
        %v2242 = vsel %vm363, %v2240, %v2241
        %v2243 = vrot.slane %v2236, 6
        %v2244 = vsel %vm363, %v2241, %v2243
        %2245 = vrot.lane.b32.xlu0 %v2242, 123
        %v2246 = vpop.permute.xlu0 %2245
        %2247 = vrot.lane.b32.xlu0 %v2244, 123
        %v2248 = vpop.permute.xlu0 %2247
        %v2251 = vadd.f32 %v2163, %v2246
        %v2252 = vadd.f32 %v2164, %v2248
        %v2253 = vstv %s182
        %v2254 = vmul.f32 %v2253, %v550
        %v2255 = vmul.f32 %v2253, %v551
        %2258 = vrot.lane.b32.xlu0 %v2254, 122
        %v2259 = vpop.permute.xlu0 %2258
        %2260 = vrot.lane.b32.xlu0 %v2255, 122
        %v2261 = vpop.permute.xlu0 %2260
        %v2264 = vadd.f32 %v2231, %v2259
        %v2265 = vadd.f32 %v2232, %v2261
        %v2266 = vstv %s231
        %v2267 = vmul.f32 %v2266, %v658
        %v2268 = vmul.f32 %v2266, %v659
        %2271 = vrot.lane.b32.xlu0 %v2267, 122
        %v2272 = vpop.permute.xlu0 %2271
        %2273 = vrot.lane.b32.xlu0 %v2268, 122
        %v2274 = vpop.permute.xlu0 %2273
        %v2277 = vadd.f32 %v2251, %v2272
        %v2278 = vadd.f32 %v2252, %v2274
        %v2279 = vstv %s189
        %v2280 = vmul.f32 %v2279, %v550
        %v2281 = vmul.f32 %v2279, %v551
        %v2282 = vmul.f32 %v2279, %v552
        %2286 = vrot.lane.b32.xlu0 %v2280, 122
        %v2287 = vpop.permute.xlu0 %2286
        %2288 = vrot.lane.b32.xlu0 %v2281, 122
        %v2289 = vpop.permute.xlu0 %2288
        %2290 = vrot.lane.b32.xlu0 %v2282, 122
        %v2291 = vpop.permute.xlu0 %2290
        %v2295 = vadd.f32 %v2186, %v2287
        %v2296 = vadd.f32 %v2187, %v2289
        %v2297 = vadd.f32 %v2188, %v2291
        %v2298 = vstv %s238
        %v2299 = vmul.f32 %v2298, %v658
        %v2300 = vmul.f32 %v2298, %v659
        %v2301 = vmul.f32 %v2298, %v660
        %2305 = vrot.lane.b32.xlu0 %v2299, 122
        %v2306 = vpop.permute.xlu0 %2305
        %2307 = vrot.lane.b32.xlu0 %v2300, 122
        %v2308 = vpop.permute.xlu0 %2307
        %2309 = vrot.lane.b32.xlu0 %v2301, 122
        %v2310 = vpop.permute.xlu0 %2309
        %v2314 = vadd.f32 %v2210, %v2306
        %v2315 = vadd.f32 %v2211, %v2308
        %v2316 = vadd.f32 %v2212, %v2310
        %v2317 = vstv %s196
        %v2318 = vmul.f32 %v2317, %v550
        %v2319 = vmul.f32 %v2317, %v551
        %v2320 = vmul.f32 %v2317, %v552
        %v2324 = vrot.slane %v2318, 2
        %v2325 = vrot.slane %v2319, 2
        %v2326 = vsel %vm370, %v2324, %v2325
        %v2327 = vrot.slane %v2320, 2
        %v2328 = vsel %vm370, %v2325, %v2327
        %2329 = vrot.lane.b32.xlu0 %v2326, 122
        %v2330 = vpop.permute.xlu0 %2329
        %2331 = vrot.lane.b32.xlu0 %v2328, 122
        %v2332 = vpop.permute.xlu0 %2331
        %v2335 = vadd.f32 %v2264, %v2330
        %v2336 = vadd.f32 %v2265, %v2332
        %v2337 = vstv %s245
        %v2338 = vmul.f32 %v2337, %v658
        %v2339 = vmul.f32 %v2337, %v659
        %v2340 = vmul.f32 %v2337, %v660
        %v2344 = vrot.slane %v2338, 2
        %v2345 = vrot.slane %v2339, 2
        %v2346 = vsel %vm370, %v2344, %v2345
        %v2347 = vrot.slane %v2340, 2
        %v2348 = vsel %vm370, %v2345, %v2347
        %2349 = vrot.lane.b32.xlu0 %v2346, 122
        %v2350 = vpop.permute.xlu0 %2349
        %2351 = vrot.lane.b32.xlu0 %v2348, 122
        %v2352 = vpop.permute.xlu0 %2351
        %v2355 = vadd.f32 %v2277, %v2350
        %v2356 = vadd.f32 %v2278, %v2352
        %v2357 = vstv %s203
        %v2358 = vmul.f32 %v2357, %v550
        %v2359 = vmul.f32 %v2357, %v551
        %v2360 = vmul.f32 %v2357, %v552
        %v2364 = vrot.slane %v2358, 2
        %v2365 = vrot.slane %v2359, 2
        %v2366 = vsel %vm370, %v2364, %v2365
        %v2367 = vrot.slane %v2360, 2
        %v2368 = vsel %vm370, %v2365, %v2367
        %2369 = vrot.lane.b32.xlu0 %v2366, 122
        %v2370 = vpop.permute.xlu0 %2369
        %2371 = vrot.lane.b32.xlu0 %v2368, 122
        %v2372 = vpop.permute.xlu0 %2371
        %2373 = vrot.lane.b32.xlu0 %v2367, 122
        %v2374 = vpop.permute.xlu0 %2373
        %v2378 = vadd.f32 %v2295, %v2370
        %v2379 = vadd.f32 %v2296, %v2372
        %v2380 = vadd.f32 %v2297, %v2374
        %v2381 = vstv %s252
        %v2382 = vmul.f32 %v2381, %v658
        %v2383 = vmul.f32 %v2381, %v659
        %v2384 = vmul.f32 %v2381, %v660
        %v2388 = vrot.slane %v2382, 2
        %v2389 = vrot.slane %v2383, 2
        %v2390 = vsel %vm370, %v2388, %v2389
        %v2391 = vrot.slane %v2384, 2
        %v2392 = vsel %vm370, %v2389, %v2391
        %2393 = vrot.lane.b32.xlu0 %v2390, 122
        %v2394 = vpop.permute.xlu0 %2393
        %2395 = vrot.lane.b32.xlu0 %v2392, 122
        %v2396 = vpop.permute.xlu0 %2395
        %2397 = vrot.lane.b32.xlu0 %v2391, 122
        %v2398 = vpop.permute.xlu0 %2397
        %v2402 = vadd.f32 %v2314, %v2394
        %v2403 = vadd.f32 %v2315, %v2396
        %v2404 = vadd.f32 %v2316, %v2398
        %v2405 = vstv %s210
        %v2406 = vmul.f32 %v2405, %v550
        %v2407 = vmul.f32 %v2405, %v551
        %v2408 = vmul.f32 %v2405, %v552
        %v2412 = vrot.slane %v2406, 4
        %v2413 = vrot.slane %v2407, 4
        %v2414 = vsel %vm281, %v2412, %v2413
        %v2415 = vrot.slane %v2408, 4
        %v2416 = vsel %vm281, %v2413, %v2415
        %2417 = vrot.lane.b32.xlu0 %v2414, 122
        %v2418 = vpop.permute.xlu0 %2417
        %2419 = vrot.lane.b32.xlu0 %v2416, 122
        %v2420 = vpop.permute.xlu0 %2419
        %v2423 = vadd.f32 %v2335, %v2418
        %v2424 = vadd.f32 %v2336, %v2420
        %v2425 = vstv %s259
        %v2426 = vmul.f32 %v2425, %v658
        %v2427 = vmul.f32 %v2425, %v659
        %v2428 = vmul.f32 %v2425, %v660
        %v2432 = vrot.slane %v2426, 4
        %v2433 = vrot.slane %v2427, 4
        %v2434 = vsel %vm281, %v2432, %v2433
        %v2435 = vrot.slane %v2428, 4
        %v2436 = vsel %vm281, %v2433, %v2435
        %2437 = vrot.lane.b32.xlu0 %v2434, 122
        %v2438 = vpop.permute.xlu0 %2437
        %2439 = vrot.lane.b32.xlu0 %v2436, 122
        %v2440 = vpop.permute.xlu0 %2439
        %v2443 = vadd.f32 %v2355, %v2438
        %v2444 = vadd.f32 %v2356, %v2440
        %v2445 = vstv %s217
        %v2446 = vmul.f32 %v2445, %v550
        %v2447 = vmul.f32 %v2445, %v551
        %v2448 = vmul.f32 %v2445, %v552
        %v2452 = vrot.slane %v2446, 4
        %v2453 = vrot.slane %v2447, 4
        %v2454 = vsel %vm281, %v2452, %v2453
        %v2455 = vrot.slane %v2448, 4
        %v2456 = vsel %vm281, %v2453, %v2455
        %2457 = vrot.lane.b32.xlu0 %v2454, 122
        %v2458 = vpop.permute.xlu0 %2457
        %2459 = vrot.lane.b32.xlu0 %v2456, 122
        %v2460 = vpop.permute.xlu0 %2459
        %2461 = vrot.lane.b32.xlu0 %v2455, 122
        %v2462 = vpop.permute.xlu0 %2461
        %v2466 = vadd.f32 %v2378, %v2458
        %v2467 = vadd.f32 %v2379, %v2460
        %v2468 = vadd.f32 %v2380, %v2462
        %v2469 = vstv %s266
        %v2470 = vmul.f32 %v2469, %v658
        %v2471 = vmul.f32 %v2469, %v659
        %v2472 = vmul.f32 %v2469, %v660
        %v2476 = vrot.slane %v2470, 4
        %v2477 = vrot.slane %v2471, 4
        %v2478 = vsel %vm281, %v2476, %v2477
        %v2479 = vrot.slane %v2472, 4
        %v2480 = vsel %vm281, %v2477, %v2479
        %2481 = vrot.lane.b32.xlu0 %v2478, 122
        %v2482 = vpop.permute.xlu0 %2481
        %2483 = vrot.lane.b32.xlu0 %v2480, 122
        %v2484 = vpop.permute.xlu0 %2483
        %2485 = vrot.lane.b32.xlu0 %v2479, 122
        %v2486 = vpop.permute.xlu0 %2485
        %v2490 = vadd.f32 %v2402, %v2482
        %v2491 = vadd.f32 %v2403, %v2484
        %v2492 = vadd.f32 %v2404, %v2486
        %v2493 = vstv %s224
        %v2494 = vmul.f32 %v2493, %v550
        %v2495 = vmul.f32 %v2493, %v551
        %v2496 = vmul.f32 %v2493, %v552
        %v2500 = vrot.slane %v2494, 6
        %v2501 = vrot.slane %v2495, 6
        %v2502 = vsel %vm363, %v2500, %v2501
        %v2503 = vrot.slane %v2496, 6
        %v2504 = vsel %vm363, %v2501, %v2503
        %2505 = vrot.lane.b32.xlu0 %v2502, 122
        %v2506 = vpop.permute.xlu0 %2505
        %2507 = vrot.lane.b32.xlu0 %v2504, 122
        %v2508 = vpop.permute.xlu0 %2507
        %v2511 = vadd.f32 %v2423, %v2506
        %v2512 = vadd.f32 %v2424, %v2508
        %v2513 = vstv %s273
        %v2514 = vmul.f32 %v2513, %v658
        %v2515 = vmul.f32 %v2513, %v659
        %v2516 = vmul.f32 %v2513, %v660
        %v2520 = vrot.slane %v2514, 6
        %v2521 = vrot.slane %v2515, 6
        %v2522 = vsel %vm363, %v2520, %v2521
        %v2523 = vrot.slane %v2516, 6
        %v2524 = vsel %vm363, %v2521, %v2523
        %2525 = vrot.lane.b32.xlu0 %v2522, 122
        %v2526 = vpop.permute.xlu0 %2525
        %2527 = vrot.lane.b32.xlu0 %v2524, 122
        %v2528 = vpop.permute.xlu0 %2527
        %v2531 = vadd.f32 %v2443, %v2526
        %v2532 = vadd.f32 %v2444, %v2528
        %v2536 = vrot.slane %v2466, 1
        %v2537 = vrot.slane %v2467, 1
        %v2538 = vsel %vm372, %v2536, %v2537
        %v2539 = vrot.slane %v2468, 1
        %v2540 = vsel %vm372, %v2537, %v2539
        %v2543 = vadd.f32 %v2511, %v2538
        %v2544 = vadd.f32 %v2512, %v2540
        %v2548 = vrot.slane %v2490, 1
        %v2549 = vrot.slane %v2491, 1
        %v2550 = vsel %vm372, %v2548, %v2549
        %v2551 = vrot.slane %v2492, 1
        %v2552 = vsel %vm372, %v2549, %v2551
        %v2555 = vadd.f32 %v2531, %v2550
        %v2556 = vadd.f32 %v2532, %v2552
        %v2557 = vadd.f32 %v2543, %v2555
        %v2558 = vadd.f32 %v2544, %v2556
        %v2559 = vxor.u32 %v2557, 2147483648
        %v2560 = vxor.u32 %v2558, 2147483648
        %v2561 = vmul.f32 %v2559, 1.442695
        %v2562 = vpow.pop %v2561
        %v2563 = vmul.f32 %v2560, 1.442695
        %v2564 = vpow.pop %v2563
        %v2565 = vadd.f32 %v2562, 1.0
        %v2566 = vadd.f32 %v2564, 1.0
        %v2567 = vrcp.pop %v2565
        %v2568 = vmul.f32 %v2565, %v2567
        %v2569 = vsub.f32 1.0, %v2568
        %v2570 = vmul.f32 %v2567, %v2569
        %v2571 = vadd.f32 %v2567, %v2570
        %vm2572 = vweird.f32 %v2565
        %vm2573 = vweird.f32 %v2567
        %vm2574 = vmor %vm2572, %vm2573
        %v2575 = vsel %vm2574, %v2567, %v2571
        %v2576 = vand.u32 2147483647, %v2565
        %vm2577 = vcmp.eq.f32.partialorder %v2576, 8.507059e+37
        %v2578 = vand.u32 %v2565, 2147483648
        %v2579 = vor.u32 1.1754944e-38, %v2578
        %v2580 = vsel %vm2577, %v2579, %v2575
        %v2581 = vmul.f32 1.0, %v2580
        %v2582 = vrcp.pop %v2566
        %v2583 = vmul.f32 %v2566, %v2582
        %v2584 = vsub.f32 1.0, %v2583
        %v2585 = vmul.f32 %v2582, %v2584
        %v2586 = vadd.f32 %v2582, %v2585
        %vm2587 = vweird.f32 %v2566
        %vm2588 = vweird.f32 %v2582
        %vm2589 = vmor %vm2587, %vm2588
        %v2590 = vsel %vm2589, %v2582, %v2586
        %v2591 = vand.u32 2147483647, %v2566
        %vm2592 = vcmp.eq.f32.partialorder %v2591, 8.507059e+37
        %v2593 = vand.u32 %v2566, 2147483648
        %v2594 = vor.u32 1.1754944e-38, %v2593
        %v2595 = vsel %vm2592, %v2594, %v2590
        %v2596 = vmul.f32 1.0, %v2595
        %v2598 = vrot.slane %v2581, 1
        %2599 = vrot.lane.b32.xlu0 %v2598, 16
        %v2600 = vpop.permute.xlu0 %2599
        %v2602 = vrot.slane %v2581, 2
        %2603 = vrot.lane.b32.xlu0 %v2602, 32
        %v2604 = vpop.permute.xlu0 %2603
        %v2606 = vrot.slane %v2581, 3
        %2607 = vrot.lane.b32.xlu0 %v2606, 48
        %v2608 = vpop.permute.xlu0 %2607
        %v2610 = vrot.slane %v2581, 4
        %2611 = vrot.lane.b32.xlu0 %v2610, 64
        %v2612 = vpop.permute.xlu0 %2611
        %v2614 = vrot.slane %v2581, 5
        %2615 = vrot.lane.b32.xlu0 %v2614, 80
        %v2616 = vpop.permute.xlu0 %2615
        %v2618 = vrot.slane %v2581, 6
        %2619 = vrot.lane.b32.xlu0 %v2618, 96
        %v2620 = vpop.permute.xlu0 %2619
        %v2622 = vrot.slane %v2581, 7
        %2623 = vrot.lane.b32.xlu0 %v2622, 112
        %v2624 = vpop.permute.xlu0 %2623
        %v2627 = vrot.slane %v2596, 1
        %2628 = vrot.lane.b32.xlu0 %v2627, 16
        %v2629 = vpop.permute.xlu0 %2628
        %v2631 = vrot.slane %v2596, 2
        %2632 = vrot.lane.b32.xlu0 %v2631, 32
        %v2633 = vpop.permute.xlu0 %2632
        %v2635 = vrot.slane %v2596, 3
        %2636 = vrot.lane.b32.xlu0 %v2635, 48
        %v2637 = vpop.permute.xlu0 %2636
        %v2639 = vrot.slane %v2596, 4
        %2640 = vrot.lane.b32.xlu0 %v2639, 64
        %v2641 = vpop.permute.xlu0 %2640
        %v2643 = vrot.slane %v2596, 5
        %2644 = vrot.lane.b32.xlu0 %v2643, 80
        %v2645 = vpop.permute.xlu0 %2644
        %v2647 = vrot.slane %v2596, 6
        %2648 = vrot.lane.b32.xlu0 %v2647, 96
        %v2649 = vpop.permute.xlu0 %2648
        %v2651 = vrot.slane %v2596, 7
        %2652 = vrot.lane.b32.xlu0 %v2651, 112
        %v2653 = vpop.permute.xlu0 %2652
        %vm2655 = vcmask 130048
        %v2656 = vsel %vm2655, %v2581, %v2600
        %vm2657 = vcmask 261120
        %v2658 = vsel %vm2657, %v2656, %v2604
        %vm2659 = vcmask 392192
        %v2660 = vsel %vm2659, %v2658, %v2608
        %vm2661 = vcmask 523264
        %v2662 = vsel %vm2661, %v2660, %v2612
        %vm2663 = vcmask 654336
        %v2664 = vsel %vm2663, %v2662, %v2616
        %vm2665 = vcmask 785408
        %v2666 = vsel %vm2665, %v2664, %v2620
        %vm2667 = vcmask 916480
        %v2668 = vsel %vm2667, %v2666, %v2624
        %v2669 = vsel %vm2655, %v2596, %v2629
        %v2670 = vsel %vm2657, %v2669, %v2633
        %v2671 = vsel %vm2659, %v2670, %v2637
        %v2672 = vsel %vm2661, %v2671, %v2641
        %v2673 = vsel %vm2663, %v2672, %v2645
        %v2674 = vsel %vm2665, %v2673, %v2649
        %v2675 = vsel %vm2667, %v2674, %v2653
        %v2676 = vperm.slane %v2668, 0
        %v2677 = vperm.slane %v2675, 0
        %v2680 = vrot.slane %v2677, 4
        %v2681 = vsel %vm281, %v2676, %v2680
        %v2683 = vmul.f32 %v274, %v2681
        %2684 = vst [vmem:[%s175] sm:$0xff] %v2683
        %s2685 = sand.u32 %s75, 1
        %s2686 = scalar_lea.sflag [#allocation4], %s2685
        %s2687 = sand.u32 %s75, 1
        %s2688 = smul.addr %s2687, 8
        %s2689 = scalar_lea.vmem [#allocation7], %s2688
        // Predicated region
        $region37: #{tpu_custom_call.1} parent=27 // pred_check
          %p2690 = pneg %p85
        $region38: #{tpu_custom_call.1} parent=27 // pred_check_branch
          %2692 = sbr.rel (%p2690) target = $region40
        $region39: #{tpu_custom_call.1} parent=27 // pred_region
          %2694 = vsyncadd %s2686, 0
          %s2695 = smul.addr %s20, 2
          %s2696 = smul.addr %s2695, 4
          %s2697 = scalar_lea.hbm %s2, %s2696
          %s2699 = sshll.u32 %s2689, 4
          %s2700 = int_to_ptr.vmem [resolvable:$true] %s2699
          %s2701 = sshll.u32 %s2697, 4
          %s2702 = int_to_ptr.hbm [resolvable:$true] %s2701
          %2704 = dma.vmem_to_hbm [thread:$0]  %s2700, 128, %s2702, %s2686
        $region40: #{tpu_custom_call.1} parent=27 // pred_fallthru
          _
      $region28: #{tpu_custom_call.1} parent=5 // pred_fallthru
        _
      %p2705 = scmp.le.s32.totalorder 2, %s15
      // Predicated region
      $region41: #{tpu_custom_call.1} parent=5 // pred_check
        %p2706 = pneg %p2705
      $region42: #{tpu_custom_call.1} parent=5 // pred_check_branch
        %2708 = sbr.rel (%p2706) target = $region44
      $region43: #{tpu_custom_call.1} parent=5 // pred_region
        %s2709 = ssub.s32 %s15, 2
        // Predicated region
        $region45: #{tpu_custom_call.1} parent=43 // pred_check
          %p2710 = pneg %p91
        $region46: #{tpu_custom_call.1} parent=43 // pred_check_branch
          %2712 = sbr.rel (%p2710) target = $region48
        $region47: #{tpu_custom_call.1} parent=43 // pred_region
          %s2713 = sand.u32 %s76, 1
          %s2714 = scalar_lea.sflag [#allocation4], %s2713
          %s2715 = sand.u32 %s76, 1
          %s2716 = smul.addr %s2715, 8
          %s2717 = scalar_lea.vmem [#allocation7], %s2716
          %2719 = dma.done %s2714, 128
        $region48: #{tpu_custom_call.1} parent=43 // pred_fallthru
          _
      $region44: #{tpu_custom_call.1} parent=5 // pred_fallthru
        _
    $region6: #{tpu_custom_call.1} parent=1 // loop_footer
      %s19 = sadd.s32 1, %s15
    $region7: #{tpu_custom_call.1} parent=1 // loop_footer_branch
      %14 = sbr.rel target = $region3
    $region8: #{tpu_custom_call.1} parent=1 // loop_exit
      _
    %2720 = vsyncpa [#allocation3], 1
    %s2721 = scalar_lea.sflag [#allocation3], 1
    %2722 = vsyncpa %s2721, 1
    %2723 = vsyncpa [#allocation4], 1
    %s2724 = scalar_lea.sflag [#allocation4], 1
    %2725 = vsyncpa %s2724, 1
    %2726 = vsyncpa [#allocation5], 1
    %s2727 = scalar_lea.sflag [#allocation5], 1
    %2728 = vsyncpa %s2727, 1

</llo_original>
